<compile_context>
chip_gen: v7x
topology: tpu7x:2x2x1
jax: 0.10.0
libtpu: 0.0.40
codegen_flags: <defaults>
</compile_context>

<pallas_src>
import functools

import jax
import jax.numpy as jnp
from jax import lax
from jax.experimental import pallas as pl
from jax.experimental.pallas import tpu as pltpu


# ----------------------------- hardware profile -----------------------------
def _hw_profile():
    """Generation-aware VMEM limit / tile budget / TensorCore count (defensive, with fallbacks)."""
    kind = ""
    try:
        kind = jax.devices()[0].device_kind.lower()
    except Exception:
        pass

    vmem_cap = None
    try:
        info = pltpu.get_tpu_info()
        cap = getattr(info, "vmem_capacity_bytes", None)
        if isinstance(cap, int) and cap > 0:
            vmem_cap = cap
    except Exception:
        pass
    if vmem_cap is None:
        if "7" in kind:                      # v7x: 64 MiB per TensorCore
            vmem_cap = 64 * 1024 * 1024
        elif kind:                           # v4 / v5e / v5p / v6e: 128 MiB
            vmem_cap = 128 * 1024 * 1024
        else:                                # unknown backend: be conservative
            vmem_cap = 64 * 1024 * 1024

    vmem_limit = min((vmem_cap * 3) // 4, 100 * 1024 * 1024)      # 96 MiB on v6e, 48 MiB on v7x
    tile_budget = max(vmem_limit - 4 * 1024 * 1024, 8 * 1024 * 1024)
    # 2 TensorCores per chip on v7x and the v4/v5p megacore parts; 1 on v5e/v6e.
    num_cores = 2 if any(m in kind for m in ("7x", "v7", "v4", "v5p")) else 1
    return {"kind": kind, "vmem_limit": int(vmem_limit), "tile_budget": int(tile_budget),
            "num_cores": num_cores}


# ----------------------------- helpers -----------------------------
def _reorder_gates(w, H):
    """PyTorch LSTM gate order [i, f, g, o] -> [i, f, o, g] (sigmoid gates contiguous)."""
    return jnp.concatenate([w[:H], w[H:2 * H], w[3 * H:], w[2 * H:3 * H]], axis=0)


def _matmul_tiles(M, N, K, bx, bw, bo, budget):
    """Pick (tm, tn) for the tiled matmul from an explicit double-buffer VMEM accounting.

    Priority (per perf review): maximize the resident row tile tm (ideally tm == M) so the weight
    streams from HBM as few times as possible; tn up to 1024 lanes, shrunk only if it starves tm.
    """
    tn = N if N <= 1024 else 1024
    while True:
        fixed = 2 * (tn * K * bw + tn * 4)          # weight tile + bias tile (double-buffered)
        per_row = 2 * (K * bx + tn * bo)            # x row + out row (double-buffered)
        tm_cap = (budget - fixed) // per_row if budget > fixed else 0
        if tm_cap >= min(M, 256) or tn <= 128 or tn == N:
            break
        tn = max(128, tn // 2)

    if tm_cap >= M:
        tm = M                                      # full extent: always layout-legal
    elif tm_cap >= 128:
        tm = (tm_cap // 128) * 128                  # lane/MXU-friendly row tile
    else:
        tm = max(8, (tm_cap // 8) * 8)              # sublane-quantized fallback
    tm = min(tm, M)
    if tm < 8:
        tm = min(M, 8)
    return tm, tn


def _recurrence_tiles(T, B, H, bytes_gx, bytes_out, bytes_whh, budget, num_cores):
    """Batch split (only on 2-core parts) and budget-derived time chunk for the recurrence."""
    Bb = B
    if num_cores >= 2 and B >= 16 and B % 2 == 0 and (B // 2) % 8 == 0:
        Bb = B // 2                                  # one batch half per TensorCore
    fixed = 4 * H * H * bytes_whh + 2 * Bb * H * 4   # single-buffered W_hh + h/c scratch
    per_step = 2 * Bb * 4 * H * bytes_gx + 2 * Bb * H * bytes_out
    cap = (budget - fixed) // per_step if budget > fixed else 1
    tc_max = max(1, min(32, T, int(cap)))
    for tc in range(tc_max, 0, -1):
        if T % tc == 0:
            return Bb, tc
    return Bb, 1


# ----------------------------- tiled matmul kernel: x @ W(+T) + b -----------------------------
def _matmul_bias_kernel(x_ref, w_ref, b_ref, o_ref, *, trans_b):
    # x: (tm, K); w: (tn, K) if trans_b else (K, tn); b: (1, tn) f32 -> o: (tm, tn)
    if trans_b:
        acc = lax.dot_general(
            x_ref[...], w_ref[...],
            dimension_numbers=(((1,), (1,)), ((), ())),   # contract on K (q@k^T style, MXU-native)
            preferred_element_type=jnp.float32,
        )
    else:
        acc = jnp.dot(x_ref[...], w_ref[...], preferred_element_type=jnp.float32)
    o_ref[...] = (acc + b_ref[...]).astype(o_ref.dtype)


def matmul_bias(x, w, b, *, trans_b, out_dtype, hw):
    """x: (M, K); w: (N, K) if trans_b else (K, N); b: (1, N) f32 -> (M, N)."""
    M, K = x.shape
    N = w.shape[0] if trans_b else w.shape[1]
    bx = x.dtype.itemsize
    bw = w.dtype.itemsize
    bo = jnp.dtype(out_dtype).itemsize
    tm, tn = _matmul_tiles(M, N, K, bx, bw, bo, hw["tile_budget"])

    if trans_b:
        w_spec = pl.BlockSpec((tn, K), lambda i, j: (j, 0))
    else:
        w_spec = pl.BlockSpec((K, tn), lambda i, j: (0, j))

    # j (output columns) innermost: the x row tile stays VMEM-resident while weight tiles stream.
    grid = (pl.cdiv(M, tm), pl.cdiv(N, tn))
    return pl.pallas_call(
        functools.partial(_matmul_bias_kernel, trans_b=trans_b),
        out_shape=jax.ShapeDtypeStruct((M, N), out_dtype),
        grid_spec=pltpu.PrefetchScalarGridSpec(
            num_scalar_prefetch=0,
            grid=grid,
            in_specs=[
                pl.BlockSpec((tm, K), lambda i, j: (i, 0)),
                w_spec,
                pl.BlockSpec((1, tn), lambda i, j: (0, j)),
            ],
            out_specs=pl.BlockSpec((tm, tn), lambda i, j: (i, j)),
        ),
        compiler_params=pltpu.CompilerParams(
            dimension_semantics=("parallel", "parallel"),   # megacore-shardable
            vmem_limit_bytes=hw["vmem_limit"],
        ),
    )(x, w, b)


# ----------------------------- LSTM recurrence kernel -----------------------------
def lstm_rec_kernel(gx_ref, whh_ref, out_ref, h_ref, c_ref):
    # gx_ref : (Tc, Bb, 4H) precomputed x @ W_ih^T + (b_ih + b_hh), gate order [i, f, o, g]
    # whh_ref: (H, 4H) compute dtype, pre-transposed, single-buffered constant block
    # out_ref: (Tc, Bb, H) compute dtype
    # h_ref, c_ref: (Bb, H) f32 VMEM scratch, persistent across the serial time axis
    @pl.when(pl.program_id(1) == 0)                    # start of this batch block's time sweep
    def _():
        h_ref[...] = jnp.zeros_like(h_ref)
        c_ref[...] = jnp.zeros_like(c_ref)

    H = h_ref.shape[-1]
    Tc = gx_ref.shape[0]
    whh = whh_ref[...]                                 # stays VMEM-resident for all Tc steps
    cdt = whh.dtype
    h = h_ref[...]
    c = c_ref[...]
    for s in range(Tc):                                # static unroll over the time chunk (<=32)
        # h @ W_hh: the only matmul left inside the serial loop (plain MXU-native layout).
        hh = jnp.dot(h.astype(cdt), whh, preferred_element_type=jnp.float32)
        gates = gx_ref[s].astype(jnp.float32) + hh     # (Bb, 4H), gate math kept in f32 (v5e-safe)
        sig = jax.nn.sigmoid(gates[:, :3 * H])         # fused i/f/o sigmoid (contiguous slice)
        i_g = sig[:, :H]
        f_g = sig[:, H:2 * H]
        o_g = sig[:, 2 * H:]
        g_g = jnp.tanh(gates[:, 3 * H:])
        c = f_g * c + i_g * g_g
        h = o_g * jnp.tanh(c)
        out_ref[s] = h.astype(out_ref.dtype)
    h_ref[...] = h
    c_ref[...] = c


def lstm_recurrence(gates_x, w_hh_t, compute_dtype, *, hw):
    """gates_x: (T, B, 4H) time-major; w_hh_t: (H, 4H) pre-transposed. Returns (T, B, H)."""
    T, B, H4 = gates_x.shape
    H = H4 // 4
    cdt = jnp.dtype(compute_dtype)
    Bb, Tc = _recurrence_tiles(
        T, B, H,
        bytes_gx=gates_x.dtype.itemsize, bytes_out=cdt.itemsize, bytes_whh=cdt.itemsize,
        budget=hw["tile_budget"], num_cores=hw["num_cores"],
    )
    grid = (B // Bb, T // Tc)                          # batch blocks parallel, time serial (last)
    return pl.pallas_call(
        lstm_rec_kernel,
        out_shape=jax.ShapeDtypeStruct((T, B, H), cdt),
        grid_spec=pltpu.PrefetchScalarGridSpec(
            num_scalar_prefetch=0,
            grid=grid,
            in_specs=[
                pl.BlockSpec((Tc, Bb, H4), lambda b, t: (t, b, 0)),
                # Constant-index weight: single-buffer instead of the default double buffer.
                pl.BlockSpec((H, H4), lambda b, t: (0, 0), pipeline_mode=pl.Buffered(1)),
            ],
            out_specs=pl.BlockSpec((Tc, Bb, H), lambda b, t: (t, b, 0)),
            scratch_shapes=[
                pltpu.VMEM((Bb, H), jnp.float32),      # h state (per-core on 2-TC parts)
                pltpu.VMEM((Bb, H), jnp.float32),      # c state
            ],
        ),
        compiler_params=pltpu.CompilerParams(
            dimension_semantics=("parallel", "arbitrary"),   # batch across cores, serial time
            vmem_limit_bytes=hw["vmem_limit"],
        ),
    )(gates_x, w_hh_t.astype(cdt))


# ----------------------------- full forward -----------------------------
def lm_lstm_forward(params, input_ids, compute_dtype=jnp.float32):
    """input_ids: (B, T) int32 -> logits (B, V, T) f32, matching the PyTorch module."""
    B, T = input_ids.shape
    emb_w = params["emb_weight"]                       # (V, E); tied with output.weight
    V, E = emb_w.shape
    H = params["w_hh"].shape[1]
    cdt = jnp.dtype(compute_dtype)
    hw = _hw_profile()

    emb_w_c = emb_w.astype(cdt)                        # bf16 weights in the bf16 path

    # Embedding lookup (gather) in plain JAX, produced directly in time-major row order.
    # emb_dropout: identity (eval mode).
    # TODO(synk): fuse this gather into the input-projection kernel (scalar-prefetched token ids +
    # per-row DMA gather) to remove the (T*B, E) HBM round trip.
    ids_tm = jnp.transpose(input_ids).reshape(-1)      # (T*B,) time-major token order
    emb_2d = emb_w_c[ids_tm]                           # (T*B, E)

    # Gate layout reorder [i,f,g,o] -> [i,f,o,g] (one-time, tiny tensors; would be folded into
    # parameter loading in a real deployment).
    w_ih_r = _reorder_gates(params["w_ih"], H)         # (4H, E)
    w_hh_r = _reorder_gates(params["w_hh"], H)         # (4H, H)
    bias_r = _reorder_gates(params["b_ih"] + params["b_hh"], H).reshape(1, 4 * H)

    # Hoisted input projection: W_ih pre-transposed once in XLA so the kernel is a plain dot.
    # gates_x is emitted in the compute dtype (bf16 in the bf16 path) to halve its HBM round trip.
    gates_x = matmul_bias(
        emb_2d, jnp.transpose(w_ih_r).astype(cdt), bias_r.astype(jnp.float32),
        trans_b=False, out_dtype=cdt, hw=hw,
    ).reshape(T, B, 4 * H)                             # time-major (T, B, 4H)

    # Serial recurrence; W_hh pre-transposed once in XLA to its MXU-natural (H, 4H) layout.
    lstm_out = lstm_recurrence(gates_x, jnp.transpose(w_hh_r), cdt, hw=hw)   # (T, B, H)
    # lstm_dropout: identity (eval mode).

    # Tied output projection: the (V, H) weight is consumed in its native PyTorch layout (trans_b
    # contraction), with the largest row tile the VMEM budget allows so the weight streams from
    # HBM as few times as possible.
    logits_2d = matmul_bias(
        lstm_out.reshape(T * B, H), emb_w_c,
        params["out_bias"].reshape(1, V).astype(jnp.float32),
        trans_b=True, out_dtype=jnp.float32, hw=hw,
    )                                                  # (T*B, V) f32

    logits = logits_2d.reshape(T, B, V)
    # Final permute to (B, V, T) to match PyTorch's .permute(0, 2, 1).
    # TODO(synk): drop this full-tensor permute if the downstream loss can consume (T*B, V) logits.
    return jnp.transpose(logits, (1, 2, 0))


# ----------------------------- pure-JAX reference (for correctness check) -----------------------------
def lm_lstm_reference(params, input_ids):
    emb_w = params["emb_weight"]
    emb = emb_w[input_ids]                             # (B, T, E)
    B, T, E = emb.shape
    H = params["w_hh"].shape[1]

    wih_t = jnp.transpose(params["w_ih"])
    whh_t = jnp.transpose(params["w_hh"])
    bias = params["b_ih"] + params["b_hh"]

    def step(carry, x_t):
        h, c = carry
        gates = x_t @ wih_t + h @ whh_t + bias
        i = jax.nn.sigmoid(gates[:, 0 * H:1 * H])
        f = jax.nn.sigmoid(gates[:, 1 * H:2 * H])
        g = jnp.tanh(gates[:, 2 * H:3 * H])
        o = jax.nn.sigmoid(gates[:, 3 * H:4 * H])
        c = f * c + i * g
        h = o * jnp.tanh(c)
        return (h, c), h

    h0 = jnp.zeros((B, H), jnp.float32)
    c0 = jnp.zeros((B, H), jnp.float32)
    _, hs = lax.scan(step, (h0, c0), jnp.transpose(emb, (1, 0, 2)))
    lstm_out = jnp.transpose(hs, (1, 0, 2))            # (B, T, H)
    logits = lstm_out @ jnp.transpose(emb_w) + params["out_bias"]
    return jnp.transpose(logits, (0, 2, 1))            # (B, V, T)


# ----------------------------- parameter init -----------------------------
def init_params(key, vocab_size, emb_size, hidden_size, pad_index=0):
    assert emb_size == hidden_size
    ks = jax.random.split(key, 5)
    scale = 0.1
    emb_weight = scale * jax.random.normal(ks[0], (vocab_size, emb_size), jnp.float32)
    emb_weight = emb_weight.at[pad_index].set(0.0)     # nn.Embedding padding_idx row = 0
    params = {
        "emb_weight": emb_weight,                      # tied with output.weight
        "w_ih": scale * jax.random.normal(ks[1], (4 * hidden_size, emb_size), jnp.float32),
        "w_hh": scale * jax.random.normal(ks[2], (4 * hidden_size, hidden_size), jnp.float32),
        "b_ih": scale * jax.random.normal(ks[3], (4 * hidden_size,), jnp.float32),
        "b_hh": scale * jax.random.normal(ks[4], (4 * hidden_size,), jnp.float32),
        "out_bias": jnp.zeros((vocab_size,), jnp.float32),
    }
    return params


if __name__ == "__main__":
    B, T = 2, 8
    EMB = HID = 32
    VOCAB = 64
    PAD = 0

    key = jax.random.PRNGKey(0)
    pkey, ikey = jax.random.split(key)
    params = init_params(pkey, VOCAB, EMB, HID, pad_index=PAD)
    input_ids = jax.random.randint(ikey, (B, T), 0, VOCAB, dtype=jnp.int32)

    ref = lm_lstm_reference(params, input_ids)

    # f32 compute path (faithful to the PyTorch forward).
    fwd_f32 = jax.jit(lambda p, x: lm_lstm_forward(p, x, compute_dtype=jnp.float32))
    out = jax.block_until_ready(fwd_f32(params, input_ids))
    assert out.shape == (B, VOCAB, T), out.shape
    assert jnp.allclose(out, ref, atol=1e-4, rtol=1e-4), float(jnp.max(jnp.abs(out - ref)))

    # bf16 MXU path (v5e/v6e/v7x optimization): bf16 matmul inputs and bf16 gates_x / lstm_out,
    # f32 accumulation and f32 gate math / recurrent state.
    fwd_bf16 = jax.jit(lambda p, x: lm_lstm_forward(p, x, compute_dtype=jnp.bfloat16))
    out_bf16 = jax.block_until_ready(fwd_bf16(params, input_ids))
    assert out_bf16.shape == (B, VOCAB, T), out_bf16.shape
    assert jnp.allclose(out_bf16, ref, atol=2e-2, rtol=2e-2), float(jnp.max(jnp.abs(out_bf16 - ref)))

    print("KERNEL_OK")
</pallas_src>

<mosaic_0001>
module attributes {stable_mosaic.version = 11 : i64} {
  func.func @_matmul_bias_kernel(%arg0: i32, %arg1: i32, %arg2: memref<16x32xf32, #tpu.memory_space<vmem>>, %arg3: memref<64x32xf32, #tpu.memory_space<vmem>>, %arg4: memref<1x64xf32, #tpu.memory_space<vmem>>, %arg5: memref<16x64xf32, #tpu.memory_space<vmem>>) attributes {dimension_semantics = [#tpu.dimension_semantics<parallel>, #tpu.dimension_semantics<parallel>], iteration_bounds = array<i64: 1, 1>, scalar_prefetch = 0 : i64, scratch_operands = 0 : i64, tpu.core_type = #tpu.core_type<tc>, window_params = [{transform_indices = @transform_0, window_bounds = array<i64: 16, 32>}, {transform_indices = @transform_1, window_bounds = array<i64: 64, 32>}, {transform_indices = @transform_2, window_bounds = array<i64: 1, 64>}, {transform_indices = @transform_3, window_bounds = array<i64: 16, 64>}]} {
    %c0 = arith.constant 0 : index
    %c0_0 = arith.constant 0 : index
    %0 = vector.load %arg2[%c0, %c0_0] : memref<16x32xf32, #tpu.memory_space<vmem>>, vector<16x32xf32>
    %c0_1 = arith.constant 0 : index
    %c0_2 = arith.constant 0 : index
    %1 = vector.load %arg3[%c0_1, %c0_2] : memref<64x32xf32, #tpu.memory_space<vmem>>, vector<64x32xf32>
    %cst = arith.constant dense<0.000000e+00> : vector<16x64xf32>
    %2 = tpu.matmul %0, %1, %cst {dimension_numbers = #tpu.dot_dimension_numbers<[1], [1], [0], [0], [0, 0, 1, 0], [], []>} : vector<16x32xf32>, vector<64x32xf32>, vector<16x64xf32> -> vector<16x64xf32>
    %c0_3 = arith.constant 0 : index
    %c0_4 = arith.constant 0 : index
    %3 = vector.load %arg4[%c0_3, %c0_4] : memref<1x64xf32, #tpu.memory_space<vmem>>, vector<1x64xf32>
    %4 = vector.broadcast %3 : vector<1x64xf32> to vector<16x64xf32>
    %5 = arith.addf %2, %4 : vector<16x64xf32>
    %c0_5 = arith.constant 0 : index
    %c0_6 = arith.constant 0 : index
    %6 = vector.load %arg5[%c0_5, %c0_6] : memref<16x64xf32, #tpu.memory_space<vmem>>, vector<16x64xf32>
    tpu.vector_store %arg5[%c0_5, %c0_6], %5 {strides = array<i32>} : memref<16x64xf32, #tpu.memory_space<vmem>>, vector<16x64xf32>,
    return
  }
  func.func @transform_0(%arg0: i32, %arg1: i32) -> (i32, i32) {
    %c0_i32 = arith.constant 0 : i32
    %c0_i32_0 = arith.constant 0 : i32
    return %arg0, %c0_i32 : i32, i32
  }
  func.func @transform_1(%arg0: i32, %arg1: i32) -> (i32, i32) {
    %c0_i32 = arith.constant 0 : i32
    %c0_i32_0 = arith.constant 0 : i32
    return %arg1, %c0_i32 : i32, i32
  }
  func.func @transform_2(%arg0: i32, %arg1: i32) -> (i32, i32) {
    %c0_i32 = arith.constant 0 : i32
    %c0_i32_0 = arith.constant 0 : i32
    return %c0_i32, %arg1 : i32, i32
  }
  func.func @transform_3(%arg0: i32, %arg1: i32) -> (i32, i32) {
    %c0_i32 = arith.constant 0 : i32
    return %arg0, %arg1 : i32, i32
  }
}

module attributes {stable_mosaic.version = 11 : i64} {
  func.func @_matmul_bias_kernel(%arg0: i32, %arg1: i32, %arg2: memref<16x32xf32, #tpu.memory_space<vmem>>, %arg3: memref<32x128xf32, #tpu.memory_space<vmem>>, %arg4: memref<1x128xf32, #tpu.memory_space<vmem>>, %arg5: memref<16x128xf32, #tpu.memory_space<vmem>>) attributes {dimension_semantics = [#tpu.dimension_semantics<parallel>, #tpu.dimension_semantics<parallel>], iteration_bounds = array<i64: 1, 1>, scalar_prefetch = 0 : i64, scratch_operands = 0 : i64, tpu.core_type = #tpu.core_type<tc>, window_params = [{transform_indices = @transform_0, window_bounds = array<i64: 16, 32>}, {transform_indices = @transform_1, window_bounds = array<i64: 32, 128>}, {transform_indices = @transform_2, window_bounds = array<i64: 1, 128>}, {transform_indices = @transform_3, window_bounds = array<i64: 16, 128>}]} {
    %c0 = arith.constant 0 : index
    %c0_0 = arith.constant 0 : index
    %0 = vector.load %arg2[%c0, %c0_0] : memref<16x32xf32, #tpu.memory_space<vmem>>, vector<16x32xf32>
    %c0_1 = arith.constant 0 : index
    %c0_2 = arith.constant 0 : index
    %1 = vector.load %arg3[%c0_1, %c0_2] : memref<32x128xf32, #tpu.memory_space<vmem>>, vector<32x128xf32>
    %cst = arith.constant dense<0.000000e+00> : vector<16x128xf32>
    %2 = tpu.matmul %0, %1, %cst {dimension_numbers = #tpu.dot_dimension_numbers<[1], [0], [0], [1], [0, 0, 1, 1], [], []>} : vector<16x32xf32>, vector<32x128xf32>, vector<16x128xf32> -> vector<16x128xf32>
    %c0_3 = arith.constant 0 : index
    %c0_4 = arith.constant 0 : index
    %3 = vector.load %arg4[%c0_3, %c0_4] : memref<1x128xf32, #tpu.memory_space<vmem>>, vector<1x128xf32>
    %4 = vector.broadcast %3 : vector<1x128xf32> to vector<16x128xf32>
    %5 = arith.addf %2, %4 : vector<16x128xf32>
    %c0_5 = arith.constant 0 : index
    %c0_6 = arith.constant 0 : index
    %6 = vector.load %arg5[%c0_5, %c0_6] : memref<16x128xf32, #tpu.memory_space<vmem>>, vector<16x128xf32>
    tpu.vector_store %arg5[%c0_5, %c0_6], %5 {strides = array<i32>} : memref<16x128xf32, #tpu.memory_space<vmem>>, vector<16x128xf32>,
    return
  }
  func.func @transform_0(%arg0: i32, %arg1: i32) -> (i32, i32) {
    %c0_i32 = arith.constant 0 : i32
    %c0_i32_0 = arith.constant 0 : i32
    return %arg0, %c0_i32 : i32, i32
  }
  func.func @transform_1(%arg0: i32, %arg1: i32) -> (i32, i32) {
    %c0_i32 = arith.constant 0 : i32
    %c0_i32_0 = arith.constant 0 : i32
    return %c0_i32, %arg1 : i32, i32
  }
  func.func @transform_2(%arg0: i32, %arg1: i32) -> (i32, i32) {
    %c0_i32 = arith.constant 0 : i32
    %c0_i32_0 = arith.constant 0 : i32
    return %c0_i32, %arg1 : i32, i32
  }
  func.func @transform_3(%arg0: i32, %arg1: i32) -> (i32, i32) {
    %c0_i32 = arith.constant 0 : i32
    return %arg0, %arg1 : i32, i32
  }
}

module attributes {stable_mosaic.version = 11 : i64} {
  func.func @lstm_rec_kernel(%arg0: i32, %arg1: i32, %arg2: memref<8x2x128xf32, #tpu.memory_space<vmem>>, %arg3: memref<32x128xf32, #tpu.memory_space<vmem>>, %arg4: memref<8x2x32xf32, #tpu.memory_space<vmem>>, %arg5: memref<2x32xf32, #tpu.memory_space<vmem>>, %arg6: memref<2x32xf32, #tpu.memory_space<vmem>>) attributes {dimension_semantics = [#tpu.dimension_semantics<parallel>, #tpu.dimension_semantics<arbitrary>], iteration_bounds = array<i64: 1, 1>, scalar_prefetch = 0 : i64, scratch_operands = 2 : i64, tpu.core_type = #tpu.core_type<tc>, window_params = [{transform_indices = @transform_0, window_bounds = array<i64: 8, 2, 128>}, {pipeline_mode = #tpu.pipeline_mode<synchronous>, transform_indices = @transform_1, window_bounds = array<i64: 32, 128>}, {transform_indices = @transform_2, window_bounds = array<i64: 8, 2, 32>}]} {
    %c0_i32 = arith.constant 0 : i32
    %0 = arith.cmpi eq, %arg1, %c0_i32 : i32
    %1 = arith.extui %0 : i1 to i32
    %c0_i32_0 = arith.constant 0 : i32
    %2 = arith.cmpi ne, %1, %c0_i32_0 : i32
    scf.if %2 {
      %cst_66 = arith.constant 0.000000e+00 : f32
      %192 = vector.broadcast %cst_66 : f32 to vector<2x32xf32>
      %c0_67 = arith.constant 0 : index
      %c0_68 = arith.constant 0 : index
      %193 = vector.load %arg5[%c0_67, %c0_68] : memref<2x32xf32, #tpu.memory_space<vmem>>, vector<2x32xf32>
      tpu.vector_store %arg5[%c0_67, %c0_68], %192 {strides = array<i32>} : memref<2x32xf32, #tpu.memory_space<vmem>>, vector<2x32xf32>,
      %cst_69 = arith.constant 0.000000e+00 : f32
      %194 = vector.broadcast %cst_69 : f32 to vector<2x32xf32>
      %c0_70 = arith.constant 0 : index
      %c0_71 = arith.constant 0 : index
      %195 = vector.load %arg6[%c0_70, %c0_71] : memref<2x32xf32, #tpu.memory_space<vmem>>, vector<2x32xf32>
      tpu.vector_store %arg6[%c0_70, %c0_71], %194 {strides = array<i32>} : memref<2x32xf32, #tpu.memory_space<vmem>>, vector<2x32xf32>,
    } else {
    }
    %c0 = arith.constant 0 : index
    %c0_1 = arith.constant 0 : index
    %3 = vector.load %arg3[%c0, %c0_1] : memref<32x128xf32, #tpu.memory_space<vmem>>, vector<32x128xf32>
    %c0_2 = arith.constant 0 : index
    %c0_3 = arith.constant 0 : index
    %4 = vector.load %arg5[%c0_2, %c0_3] : memref<2x32xf32, #tpu.memory_space<vmem>>, vector<2x32xf32>
    %c0_4 = arith.constant 0 : index
    %c0_5 = arith.constant 0 : index
    %5 = vector.load %arg6[%c0_4, %c0_5] : memref<2x32xf32, #tpu.memory_space<vmem>>, vector<2x32xf32>
    %cst = arith.constant dense<0.000000e+00> : vector<2x128xf32>
    %6 = tpu.matmul %4, %3, %cst {dimension_numbers = #tpu.dot_dimension_numbers<[1], [0], [0], [1], [0, 0, 1, 1], [], []>} : vector<2x32xf32>, vector<32x128xf32>, vector<2x128xf32> -> vector<2x128xf32>
    %c0_6 = arith.constant 0 : index
    %c0_7 = arith.constant 0 : index
    %c0_8 = arith.constant 0 : index
    %7 = vector.load %arg2[%c0_6, %c0_7, %c0_8] : memref<8x2x128xf32, #tpu.memory_space<vmem>>, vector<1x2x128xf32>
    %8 = vector.shape_cast %7 : vector<1x2x128xf32> to vector<2x128xf32>
    %9 = arith.addf %8, %6 : vector<2x128xf32>
    %10 = vector.extract_strided_slice %9 {offsets = [0, 0], sizes = [2, 96], strides = [1, 1]} : vector<2x128xf32> to vector<2x96xf32>
    %11 = arith.negf %10 : vector<2x96xf32>
    %12 = math.exp %11 : vector<2x96xf32>
    %cst_9 = arith.constant 1.000000e+00 : f32
    %13 = vector.broadcast %cst_9 : f32 to vector<2x96xf32>
    %14 = arith.addf %13, %12 : vector<2x96xf32>
    %15 = arith.divf %13, %14 : vector<2x96xf32>
    %16 = vector.extract_strided_slice %15 {offsets = [0, 0], sizes = [2, 32], strides = [1, 1]} : vector<2x96xf32> to vector<2x32xf32>
    %17 = vector.extract_strided_slice %15 {offsets = [0, 32], sizes = [2, 32], strides = [1, 1]} : vector<2x96xf32> to vector<2x32xf32>
    %18 = vector.extract_strided_slice %15 {offsets = [0, 64], sizes = [2, 32], strides = [1, 1]} : vector<2x96xf32> to vector<2x32xf32>
    %19 = vector.extract_strided_slice %9 {offsets = [0, 96], sizes = [2, 32], strides = [1, 1]} : vector<2x128xf32> to vector<2x32xf32>
    %20 = math.tanh %19 : vector<2x32xf32>
    %21 = arith.mulf %17, %5 : vector<2x32xf32>
    %22 = arith.mulf %16, %20 : vector<2x32xf32>
    %23 = arith.addf %21, %22 : vector<2x32xf32>
    %24 = math.tanh %23 : vector<2x32xf32>
    %25 = arith.mulf %18, %24 : vector<2x32xf32>
    %c0_10 = arith.constant 0 : index
    %c0_11 = arith.constant 0 : index
    %c0_12 = arith.constant 0 : index
    %26 = vector.load %arg4[%c0_10, %c0_11, %c0_12] : memref<8x2x32xf32, #tpu.memory_space<vmem>>, vector<1x2x32xf32>
    %27 = vector.shape_cast %26 : vector<1x2x32xf32> to vector<2x32xf32>
    %28 = vector.shape_cast %25 : vector<2x32xf32> to vector<1x2x32xf32>
    tpu.vector_store %arg4[%c0_10, %c0_11, %c0_12], %28 {strides = array<i32>} : memref<8x2x32xf32, #tpu.memory_space<vmem>>, vector<1x2x32xf32>,
    %cst_13 = arith.constant dense<0.000000e+00> : vector<2x128xf32>
    %29 = tpu.matmul %25, %3, %cst_13 {dimension_numbers = #tpu.dot_dimension_numbers<[1], [0], [0], [1], [0, 0, 1, 1], [], []>} : vector<2x32xf32>, vector<32x128xf32>, vector<2x128xf32> -> vector<2x128xf32>
    %c1 = arith.constant 1 : index
    %c0_14 = arith.constant 0 : index
    %c0_15 = arith.constant 0 : index
    %30 = vector.load %arg2[%c1, %c0_14, %c0_15] : memref<8x2x128xf32, #tpu.memory_space<vmem>>, vector<1x2x128xf32>
    %31 = vector.shape_cast %30 : vector<1x2x128xf32> to vector<2x128xf32>
    %32 = arith.addf %31, %29 : vector<2x128xf32>
    %33 = vector.extract_strided_slice %32 {offsets = [0, 0], sizes = [2, 96], strides = [1, 1]} : vector<2x128xf32> to vector<2x96xf32>
    %34 = arith.negf %33 : vector<2x96xf32>
    %35 = math.exp %34 : vector<2x96xf32>
    %cst_16 = arith.constant 1.000000e+00 : f32
    %36 = vector.broadcast %cst_16 : f32 to vector<2x96xf32>
    %37 = arith.addf %36, %35 : vector<2x96xf32>
    %38 = arith.divf %36, %37 : vector<2x96xf32>
    %39 = vector.extract_strided_slice %38 {offsets = [0, 0], sizes = [2, 32], strides = [1, 1]} : vector<2x96xf32> to vector<2x32xf32>
    %40 = vector.extract_strided_slice %38 {offsets = [0, 32], sizes = [2, 32], strides = [1, 1]} : vector<2x96xf32> to vector<2x32xf32>
    %41 = vector.extract_strided_slice %38 {offsets = [0, 64], sizes = [2, 32], strides = [1, 1]} : vector<2x96xf32> to vector<2x32xf32>
    %42 = vector.extract_strided_slice %32 {offsets = [0, 96], sizes = [2, 32], strides = [1, 1]} : vector<2x128xf32> to vector<2x32xf32>
    %43 = math.tanh %42 : vector<2x32xf32>
    %44 = arith.mulf %40, %23 : vector<2x32xf32>
    %45 = arith.mulf %39, %43 : vector<2x32xf32>
    %46 = arith.addf %44, %45 : vector<2x32xf32>
    %47 = math.tanh %46 : vector<2x32xf32>
    %48 = arith.mulf %41, %47 : vector<2x32xf32>
    %c1_17 = arith.constant 1 : index
    %c0_18 = arith.constant 0 : index
    %c0_19 = arith.constant 0 : index
    %49 = vector.load %arg4[%c1_17, %c0_18, %c0_19] : memref<8x2x32xf32, #tpu.memory_space<vmem>>, vector<1x2x32xf32>
    %50 = vector.shape_cast %49 : vector<1x2x32xf32> to vector<2x32xf32>
    %51 = vector.shape_cast %48 : vector<2x32xf32> to vector<1x2x32xf32>
    tpu.vector_store %arg4[%c1_17, %c0_18, %c0_19], %51 {strides = array<i32>} : memref<8x2x32xf32, #tpu.memory_space<vmem>>, vector<1x2x32xf32>,
    %cst_20 = arith.constant dense<0.000000e+00> : vector<2x128xf32>
    %52 = tpu.matmul %48, %3, %cst_20 {dimension_numbers = #tpu.dot_dimension_numbers<[1], [0], [0], [1], [0, 0, 1, 1], [], []>} : vector<2x32xf32>, vector<32x128xf32>, vector<2x128xf32> -> vector<2x128xf32>
    %c2 = arith.constant 2 : index
    %c0_21 = arith.constant 0 : index
    %c0_22 = arith.constant 0 : index
    %53 = vector.load %arg2[%c2, %c0_21, %c0_22] : memref<8x2x128xf32, #tpu.memory_space<vmem>>, vector<1x2x128xf32>
    %54 = vector.shape_cast %53 : vector<1x2x128xf32> to vector<2x128xf32>
    %55 = arith.addf %54, %52 : vector<2x128xf32>
    %56 = vector.extract_strided_slice %55 {offsets = [0, 0], sizes = [2, 96], strides = [1, 1]} : vector<2x128xf32> to vector<2x96xf32>
    %57 = arith.negf %56 : vector<2x96xf32>
    %58 = math.exp %57 : vector<2x96xf32>
    %cst_23 = arith.constant 1.000000e+00 : f32
    %59 = vector.broadcast %cst_23 : f32 to vector<2x96xf32>
    %60 = arith.addf %59, %58 : vector<2x96xf32>
    %61 = arith.divf %59, %60 : vector<2x96xf32>
    %62 = vector.extract_strided_slice %61 {offsets = [0, 0], sizes = [2, 32], strides = [1, 1]} : vector<2x96xf32> to vector<2x32xf32>
    %63 = vector.extract_strided_slice %61 {offsets = [0, 32], sizes = [2, 32], strides = [1, 1]} : vector<2x96xf32> to vector<2x32xf32>
    %64 = vector.extract_strided_slice %61 {offsets = [0, 64], sizes = [2, 32], strides = [1, 1]} : vector<2x96xf32> to vector<2x32xf32>
    %65 = vector.extract_strided_slice %55 {offsets = [0, 96], sizes = [2, 32], strides = [1, 1]} : vector<2x128xf32> to vector<2x32xf32>
    %66 = math.tanh %65 : vector<2x32xf32>
    %67 = arith.mulf %63, %46 : vector<2x32xf32>
    %68 = arith.mulf %62, %66 : vector<2x32xf32>
    %69 = arith.addf %67, %68 : vector<2x32xf32>
    %70 = math.tanh %69 : vector<2x32xf32>
    %71 = arith.mulf %64, %70 : vector<2x32xf32>
    %c2_24 = arith.constant 2 : index
    %c0_25 = arith.constant 0 : index
    %c0_26 = arith.constant 0 : index
    %72 = vector.load %arg4[%c2_24, %c0_25, %c0_26] : memref<8x2x32xf32, #tpu.memory_space<vmem>>, vector<1x2x32xf32>
    %73 = vector.shape_cast %72 : vector<1x2x32xf32> to vector<2x32xf32>
    %74 = vector.shape_cast %71 : vector<2x32xf32> to vector<1x2x32xf32>
    tpu.vector_store %arg4[%c2_24, %c0_25, %c0_26], %74 {strides = array<i32>} : memref<8x2x32xf32, #tpu.memory_space<vmem>>, vector<1x2x32xf32>,
    %cst_27 = arith.constant dense<0.000000e+00> : vector<2x128xf32>
    %75 = tpu.matmul %71, %3, %cst_27 {dimension_numbers = #tpu.dot_dimension_numbers<[1], [0], [0], [1], [0, 0, 1, 1], [], []>} : vector<2x32xf32>, vector<32x128xf32>, vector<2x128xf32> -> vector<2x128xf32>
    %c3 = arith.constant 3 : index
    %c0_28 = arith.constant 0 : index
    %c0_29 = arith.constant 0 : index
    %76 = vector.load %arg2[%c3, %c0_28, %c0_29] : memref<8x2x128xf32, #tpu.memory_space<vmem>>, vector<1x2x128xf32>
    %77 = vector.shape_cast %76 : vector<1x2x128xf32> to vector<2x128xf32>
    %78 = arith.addf %77, %75 : vector<2x128xf32>
    %79 = vector.extract_strided_slice %78 {offsets = [0, 0], sizes = [2, 96], strides = [1, 1]} : vector<2x128xf32> to vector<2x96xf32>
    %80 = arith.negf %79 : vector<2x96xf32>
    %81 = math.exp %80 : vector<2x96xf32>
    %cst_30 = arith.constant 1.000000e+00 : f32
    %82 = vector.broadcast %cst_30 : f32 to vector<2x96xf32>
    %83 = arith.addf %82, %81 : vector<2x96xf32>
    %84 = arith.divf %82, %83 : vector<2x96xf32>
    %85 = vector.extract_strided_slice %84 {offsets = [0, 0], sizes = [2, 32], strides = [1, 1]} : vector<2x96xf32> to vector<2x32xf32>
    %86 = vector.extract_strided_slice %84 {offsets = [0, 32], sizes = [2, 32], strides = [1, 1]} : vector<2x96xf32> to vector<2x32xf32>
    %87 = vector.extract_strided_slice %84 {offsets = [0, 64], sizes = [2, 32], strides = [1, 1]} : vector<2x96xf32> to vector<2x32xf32>
    %88 = vector.extract_strided_slice %78 {offsets = [0, 96], sizes = [2, 32], strides = [1, 1]} : vector<2x128xf32> to vector<2x32xf32>
    %89 = math.tanh %88 : vector<2x32xf32>
    %90 = arith.mulf %86, %69 : vector<2x32xf32>
    %91 = arith.mulf %85, %89 : vector<2x32xf32>
    %92 = arith.addf %90, %91 : vector<2x32xf32>
    %93 = math.tanh %92 : vector<2x32xf32>
    %94 = arith.mulf %87, %93 : vector<2x32xf32>
    %c3_31 = arith.constant 3 : index
    %c0_32 = arith.constant 0 : index
    %c0_33 = arith.constant 0 : index
    %95 = vector.load %arg4[%c3_31, %c0_32, %c0_33] : memref<8x2x32xf32, #tpu.memory_space<vmem>>, vector<1x2x32xf32>
    %96 = vector.shape_cast %95 : vector<1x2x32xf32> to vector<2x32xf32>
    %97 = vector.shape_cast %94 : vector<2x32xf32> to vector<1x2x32xf32>
    tpu.vector_store %arg4[%c3_31, %c0_32, %c0_33], %97 {strides = array<i32>} : memref<8x2x32xf32, #tpu.memory_space<vmem>>, vector<1x2x32xf32>,
    %cst_34 = arith.constant dense<0.000000e+00> : vector<2x128xf32>
    %98 = tpu.matmul %94, %3, %cst_34 {dimension_numbers = #tpu.dot_dimension_numbers<[1], [0], [0], [1], [0, 0, 1, 1], [], []>} : vector<2x32xf32>, vector<32x128xf32>, vector<2x128xf32> -> vector<2x128xf32>
    %c4 = arith.constant 4 : index
    %c0_35 = arith.constant 0 : index
    %c0_36 = arith.constant 0 : index
    %99 = vector.load %arg2[%c4, %c0_35, %c0_36] : memref<8x2x128xf32, #tpu.memory_space<vmem>>, vector<1x2x128xf32>
    %100 = vector.shape_cast %99 : vector<1x2x128xf32> to vector<2x128xf32>
    %101 = arith.addf %100, %98 : vector<2x128xf32>
    %102 = vector.extract_strided_slice %101 {offsets = [0, 0], sizes = [2, 96], strides = [1, 1]} : vector<2x128xf32> to vector<2x96xf32>
    %103 = arith.negf %102 : vector<2x96xf32>
    %104 = math.exp %103 : vector<2x96xf32>
    %cst_37 = arith.constant 1.000000e+00 : f32
    %105 = vector.broadcast %cst_37 : f32 to vector<2x96xf32>
    %106 = arith.addf %105, %104 : vector<2x96xf32>
    %107 = arith.divf %105, %106 : vector<2x96xf32>
    %108 = vector.extract_strided_slice %107 {offsets = [0, 0], sizes = [2, 32], strides = [1, 1]} : vector<2x96xf32> to vector<2x32xf32>
    %109 = vector.extract_strided_slice %107 {offsets = [0, 32], sizes = [2, 32], strides = [1, 1]} : vector<2x96xf32> to vector<2x32xf32>
    %110 = vector.extract_strided_slice %107 {offsets = [0, 64], sizes = [2, 32], strides = [1, 1]} : vector<2x96xf32> to vector<2x32xf32>
    %111 = vector.extract_strided_slice %101 {offsets = [0, 96], sizes = [2, 32], strides = [1, 1]} : vector<2x128xf32> to vector<2x32xf32>
    %112 = math.tanh %111 : vector<2x32xf32>
    %113 = arith.mulf %109, %92 : vector<2x32xf32>
    %114 = arith.mulf %108, %112 : vector<2x32xf32>
    %115 = arith.addf %113, %114 : vector<2x32xf32>
    %116 = math.tanh %115 : vector<2x32xf32>
    %117 = arith.mulf %110, %116 : vector<2x32xf32>
    %c4_38 = arith.constant 4 : index
    %c0_39 = arith.constant 0 : index
    %c0_40 = arith.constant 0 : index
    %118 = vector.load %arg4[%c4_38, %c0_39, %c0_40] : memref<8x2x32xf32, #tpu.memory_space<vmem>>, vector<1x2x32xf32>
    %119 = vector.shape_cast %118 : vector<1x2x32xf32> to vector<2x32xf32>
    %120 = vector.shape_cast %117 : vector<2x32xf32> to vector<1x2x32xf32>
    tpu.vector_store %arg4[%c4_38, %c0_39, %c0_40], %120 {strides = array<i32>} : memref<8x2x32xf32, #tpu.memory_space<vmem>>, vector<1x2x32xf32>,
    %cst_41 = arith.constant dense<0.000000e+00> : vector<2x128xf32>
    %121 = tpu.matmul %117, %3, %cst_41 {dimension_numbers = #tpu.dot_dimension_numbers<[1], [0], [0], [1], [0, 0, 1, 1], [], []>} : vector<2x32xf32>, vector<32x128xf32>, vector<2x128xf32> -> vector<2x128xf32>
    %c5 = arith.constant 5 : index
    %c0_42 = arith.constant 0 : index
    %c0_43 = arith.constant 0 : index
    %122 = vector.load %arg2[%c5, %c0_42, %c0_43] : memref<8x2x128xf32, #tpu.memory_space<vmem>>, vector<1x2x128xf32>
    %123 = vector.shape_cast %122 : vector<1x2x128xf32> to vector<2x128xf32>
    %124 = arith.addf %123, %121 : vector<2x128xf32>
    %125 = vector.extract_strided_slice %124 {offsets = [0, 0], sizes = [2, 96], strides = [1, 1]} : vector<2x128xf32> to vector<2x96xf32>
    %126 = arith.negf %125 : vector<2x96xf32>
    %127 = math.exp %126 : vector<2x96xf32>
    %cst_44 = arith.constant 1.000000e+00 : f32
    %128 = vector.broadcast %cst_44 : f32 to vector<2x96xf32>
    %129 = arith.addf %128, %127 : vector<2x96xf32>
    %130 = arith.divf %128, %129 : vector<2x96xf32>
    %131 = vector.extract_strided_slice %130 {offsets = [0, 0], sizes = [2, 32], strides = [1, 1]} : vector<2x96xf32> to vector<2x32xf32>
    %132 = vector.extract_strided_slice %130 {offsets = [0, 32], sizes = [2, 32], strides = [1, 1]} : vector<2x96xf32> to vector<2x32xf32>
    %133 = vector.extract_strided_slice %130 {offsets = [0, 64], sizes = [2, 32], strides = [1, 1]} : vector<2x96xf32> to vector<2x32xf32>
    %134 = vector.extract_strided_slice %124 {offsets = [0, 96], sizes = [2, 32], strides = [1, 1]} : vector<2x128xf32> to vector<2x32xf32>
    %135 = math.tanh %134 : vector<2x32xf32>
    %136 = arith.mulf %132, %115 : vector<2x32xf32>
    %137 = arith.mulf %131, %135 : vector<2x32xf32>
    %138 = arith.addf %136, %137 : vector<2x32xf32>
    %139 = math.tanh %138 : vector<2x32xf32>
    %140 = arith.mulf %133, %139 : vector<2x32xf32>
    %c5_45 = arith.constant 5 : index
    %c0_46 = arith.constant 0 : index
    %c0_47 = arith.constant 0 : index
    %141 = vector.load %arg4[%c5_45, %c0_46, %c0_47] : memref<8x2x32xf32, #tpu.memory_space<vmem>>, vector<1x2x32xf32>
    %142 = vector.shape_cast %141 : vector<1x2x32xf32> to vector<2x32xf32>
    %143 = vector.shape_cast %140 : vector<2x32xf32> to vector<1x2x32xf32>
    tpu.vector_store %arg4[%c5_45, %c0_46, %c0_47], %143 {strides = array<i32>} : memref<8x2x32xf32, #tpu.memory_space<vmem>>, vector<1x2x32xf32>,
    %cst_48 = arith.constant dense<0.000000e+00> : vector<2x128xf32>
    %144 = tpu.matmul %140, %3, %cst_48 {dimension_numbers = #tpu.dot_dimension_numbers<[1], [0], [0], [1], [0, 0, 1, 1], [], []>} : vector<2x32xf32>, vector<32x128xf32>, vector<2x128xf32> -> vector<2x128xf32>
    %c6 = arith.constant 6 : index
    %c0_49 = arith.constant 0 : index
    %c0_50 = arith.constant 0 : index
    %145 = vector.load %arg2[%c6, %c0_49, %c0_50] : memref<8x2x128xf32, #tpu.memory_space<vmem>>, vector<1x2x128xf32>
    %146 = vector.shape_cast %145 : vector<1x2x128xf32> to vector<2x128xf32>
    %147 = arith.addf %146, %144 : vector<2x128xf32>
    %148 = vector.extract_strided_slice %147 {offsets = [0, 0], sizes = [2, 96], strides = [1, 1]} : vector<2x128xf32> to vector<2x96xf32>
    %149 = arith.negf %148 : vector<2x96xf32>
    %150 = math.exp %149 : vector<2x96xf32>
    %cst_51 = arith.constant 1.000000e+00 : f32
    %151 = vector.broadcast %cst_51 : f32 to vector<2x96xf32>
    %152 = arith.addf %151, %150 : vector<2x96xf32>
    %153 = arith.divf %151, %152 : vector<2x96xf32>
    %154 = vector.extract_strided_slice %153 {offsets = [0, 0], sizes = [2, 32], strides = [1, 1]} : vector<2x96xf32> to vector<2x32xf32>
    %155 = vector.extract_strided_slice %153 {offsets = [0, 32], sizes = [2, 32], strides = [1, 1]} : vector<2x96xf32> to vector<2x32xf32>
    %156 = vector.extract_strided_slice %153 {offsets = [0, 64], sizes = [2, 32], strides = [1, 1]} : vector<2x96xf32> to vector<2x32xf32>
    %157 = vector.extract_strided_slice %147 {offsets = [0, 96], sizes = [2, 32], strides = [1, 1]} : vector<2x128xf32> to vector<2x32xf32>
    %158 = math.tanh %157 : vector<2x32xf32>
    %159 = arith.mulf %155, %138 : vector<2x32xf32>
    %160 = arith.mulf %154, %158 : vector<2x32xf32>
    %161 = arith.addf %159, %160 : vector<2x32xf32>
    %162 = math.tanh %161 : vector<2x32xf32>
    %163 = arith.mulf %156, %162 : vector<2x32xf32>
    %c6_52 = arith.constant 6 : index
    %c0_53 = arith.constant 0 : index
    %c0_54 = arith.constant 0 : index
    %164 = vector.load %arg4[%c6_52, %c0_53, %c0_54] : memref<8x2x32xf32, #tpu.memory_space<vmem>>, vector<1x2x32xf32>
    %165 = vector.shape_cast %164 : vector<1x2x32xf32> to vector<2x32xf32>
    %166 = vector.shape_cast %163 : vector<2x32xf32> to vector<1x2x32xf32>
    tpu.vector_store %arg4[%c6_52, %c0_53, %c0_54], %166 {strides = array<i32>} : memref<8x2x32xf32, #tpu.memory_space<vmem>>, vector<1x2x32xf32>,
    %cst_55 = arith.constant dense<0.000000e+00> : vector<2x128xf32>
    %167 = tpu.matmul %163, %3, %cst_55 {dimension_numbers = #tpu.dot_dimension_numbers<[1], [0], [0], [1], [0, 0, 1, 1], [], []>} : vector<2x32xf32>, vector<32x128xf32>, vector<2x128xf32> -> vector<2x128xf32>
    %c7 = arith.constant 7 : index
    %c0_56 = arith.constant 0 : index
    %c0_57 = arith.constant 0 : index
    %168 = vector.load %arg2[%c7, %c0_56, %c0_57] : memref<8x2x128xf32, #tpu.memory_space<vmem>>, vector<1x2x128xf32>
    %169 = vector.shape_cast %168 : vector<1x2x128xf32> to vector<2x128xf32>
    %170 = arith.addf %169, %167 : vector<2x128xf32>
    %171 = vector.extract_strided_slice %170 {offsets = [0, 0], sizes = [2, 96], strides = [1, 1]} : vector<2x128xf32> to vector<2x96xf32>
    %172 = arith.negf %171 : vector<2x96xf32>
    %173 = math.exp %172 : vector<2x96xf32>
    %cst_58 = arith.constant 1.000000e+00 : f32
    %174 = vector.broadcast %cst_58 : f32 to vector<2x96xf32>
    %175 = arith.addf %174, %173 : vector<2x96xf32>
    %176 = arith.divf %174, %175 : vector<2x96xf32>
    %177 = vector.extract_strided_slice %176 {offsets = [0, 0], sizes = [2, 32], strides = [1, 1]} : vector<2x96xf32> to vector<2x32xf32>
    %178 = vector.extract_strided_slice %176 {offsets = [0, 32], sizes = [2, 32], strides = [1, 1]} : vector<2x96xf32> to vector<2x32xf32>
    %179 = vector.extract_strided_slice %176 {offsets = [0, 64], sizes = [2, 32], strides = [1, 1]} : vector<2x96xf32> to vector<2x32xf32>
    %180 = vector.extract_strided_slice %170 {offsets = [0, 96], sizes = [2, 32], strides = [1, 1]} : vector<2x128xf32> to vector<2x32xf32>
    %181 = math.tanh %180 : vector<2x32xf32>
    %182 = arith.mulf %178, %161 : vector<2x32xf32>
    %183 = arith.mulf %177, %181 : vector<2x32xf32>
    %184 = arith.addf %182, %183 : vector<2x32xf32>
    %185 = math.tanh %184 : vector<2x32xf32>
    %186 = arith.mulf %179, %185 : vector<2x32xf32>
    %c7_59 = arith.constant 7 : index
    %c0_60 = arith.constant 0 : index
    %c0_61 = arith.constant 0 : index
    %187 = vector.load %arg4[%c7_59, %c0_60, %c0_61] : memref<8x2x32xf32, #tpu.memory_space<vmem>>, vector<1x2x32xf32>
    %188 = vector.shape_cast %187 : vector<1x2x32xf32> to vector<2x32xf32>
    %189 = vector.shape_cast %186 : vector<2x32xf32> to vector<1x2x32xf32>
    tpu.vector_store %arg4[%c7_59, %c0_60, %c0_61], %189 {strides = array<i32>} : memref<8x2x32xf32, #tpu.memory_space<vmem>>, vector<1x2x32xf32>,
    %c0_62 = arith.constant 0 : index
    %c0_63 = arith.constant 0 : index
    %190 = vector.load %arg5[%c0_62, %c0_63] : memref<2x32xf32, #tpu.memory_space<vmem>>, vector<2x32xf32>
    tpu.vector_store %arg5[%c0_62, %c0_63], %186 {strides = array<i32>} : memref<2x32xf32, #tpu.memory_space<vmem>>, vector<2x32xf32>,
    %c0_64 = arith.constant 0 : index
    %c0_65 = arith.constant 0 : index
    %191 = vector.load %arg6[%c0_64, %c0_65] : memref<2x32xf32, #tpu.memory_space<vmem>>, vector<2x32xf32>
    tpu.vector_store %arg6[%c0_64, %c0_65], %184 {strides = array<i32>} : memref<2x32xf32, #tpu.memory_space<vmem>>, vector<2x32xf32>,
    return
  }
  func.func @transform_0(%arg0: i32, %arg1: i32) -> (i32, i32, i32) {
    %c0_i32 = arith.constant 0 : i32
    %c0_i32_0 = arith.constant 0 : i32
    return %arg1, %arg0, %c0_i32 : i32, i32, i32
  }
  func.func @transform_1(%arg0: i32, %arg1: i32) -> (i32, i32) {
    %c0_i32 = arith.constant 0 : i32
    %c0_i32_0 = arith.constant 0 : i32
    %c0_i32_1 = arith.constant 0 : i32
    return %c0_i32, %c0_i32_0 : i32, i32
  }
  func.func @transform_2(%arg0: i32, %arg1: i32) -> (i32, i32, i32) {
    %c0_i32 = arith.constant 0 : i32
    %c0_i32_0 = arith.constant 0 : i32
    return %arg1, %arg0, %c0_i32 : i32, i32, i32
  }
}

</mosaic_0001>

<llo_original>
// kernel: _lambda_.3
$region0: #{_lambda_.3}
  #allocation0 [shape = 'u32[]', space=smem, size = 0x4, offset = 0x4, fixed_abs, tag = 'smem constant byte address 0x4 - core index']
  #allocation1 [shape = 'u32[144,128]{1,0:T(1,128)}', space=vmem, size = 0x12000, scoped, tag = 'internal scratch']
  %s0 = inlined_call_operand.hbm [shape: f32[16,32], index: 0, kind: input, shape index: {}]
  %s1 = inlined_call_operand.hbm [shape: f32[32,128], index: 1, kind: input, shape index: {}]
  %s2 = inlined_call_operand.hbm [shape: f32[1,128], index: 2, kind: input, shape index: {}]
  %s3 = inlined_call_operand.hbm [shape: f32[16,128], index: 3, kind: output, shape index: {}]
  %s4 = sld [smem:[#allocation0]]
  $region34: #{_lambda_.3} parent=0
    _
  %s6 = ssub.s32 1, %s4
  %s7 = scalar_select 0, %s6, %s4
  $region1: #{_lambda_.3} parent=0
    #allocation2 [shape = 'u8[8192]{0}', space=vmem, size = 0x2000, scoped, tag = 'input window, operand 0, single buffered']
    #allocation3 [shape = 's32[1]{0}', space=sflag, size = 0x4, scoped, tag = 'scoped memory for _lambda_.3']
    #allocation4 [shape = 's32[1]{0}', space=sflag, size = 0x4, scoped, tag = 'scoped memory for _lambda_.3']
    #allocation5 [shape = 'u8[16384]{0}', space=vmem, size = 0x4000, scoped, tag = 'input window, operand 1, single buffered']
    #allocation6 [shape = 's32[1]{0}', space=sflag, size = 0x4, scoped, tag = 'scoped memory for _lambda_.3']
    #allocation7 [shape = 'u8[512]{0}', space=vmem, size = 0x400, scoped, tag = 'input window, operand 2, single buffered']
    #allocation8 [shape = 'u8[8192]{0}', space=vmem, size = 0x2000, scoped, tag = 'output window, operand 0, single buffered']
    %8 = vsyncpa [#allocation3], 0
    %9 = vsyncpa [#allocation6], 0
    %10 = vsyncpa [#allocation4], 0
    // Predicated region
    $region2: #{_lambda_.3} parent=1 // pred_check
      _
    $region3: #{_lambda_.3} parent=1 // pred_check_branch
      %12 = sbr.rel (0) target = $region5
    $region4: #{_lambda_.3} parent=1 // pred_region
      %s14 = ssub.s32 256, 256
      %15 = vsyncadd [#allocation3], %s14
      %s16 = sshll.u32 [#allocation2], 4
      %s17 = int_to_ptr.vmem [resolvable:$true] %s16
      %22 = dma.hbm_to_vmem [thread:$0]  %s0, 256, %s17, [#allocation3], 128, 128, 8
    $region5: #{_lambda_.3} parent=1 // pred_fallthru
      _
    // Predicated region
    $region6: #{_lambda_.3} parent=1 // pred_check
      _
    $region7: #{_lambda_.3} parent=1 // pred_check_branch
      %24 = sbr.rel (0) target = $region9
    $region8: #{_lambda_.3} parent=1 // pred_region
      %s26 = ssub.s32 512, 512
      %27 = vsyncadd [#allocation6], %s26
      %s28 = sshll.u32 [#allocation5], 4
      %s29 = int_to_ptr.vmem [resolvable:$true] %s28
      %34 = dma.hbm_to_vmem [thread:$0]  %s1, 512, %s29, [#allocation6], 128, 128, 8
    $region9: #{_lambda_.3} parent=1 // pred_fallthru
      _
    // Predicated region
    $region10: #{_lambda_.3} parent=1 // pred_check
      _
    $region11: #{_lambda_.3} parent=1 // pred_check_branch
      %36 = sbr.rel (0) target = $region13
    $region12: #{_lambda_.3} parent=1 // pred_region
      %s38 = ssub.s32 16, 16
      %39 = vsyncadd [#allocation6], %s38
      %s41 = sshll.u32 [#allocation7], 4
      %s42 = int_to_ptr.vmem [resolvable:$true] %s41
      %44 = dma.hbm_to_vmem [thread:$0]  %s2, 16, %s42, [#allocation6]
    $region13: #{_lambda_.3} parent=1 // pred_fallthru
      _
    // Predicated region
    $region14: #{_lambda_.3} parent=1 // pred_check
      _
    $region15: #{_lambda_.3} parent=1 // pred_check_branch
      %46 = sbr.rel (0) target = $region17
    $region16: #{_lambda_.3} parent=1 // pred_region
      %47 = dma.done [#allocation3], 256
    $region17: #{_lambda_.3} parent=1 // pred_fallthru
      _
    // Predicated region
    $region18: #{_lambda_.3} parent=1 // pred_check
      _
    $region19: #{_lambda_.3} parent=1 // pred_check_branch
      %49 = sbr.rel (0) target = $region21
    $region20: #{_lambda_.3} parent=1 // pred_region
      %50 = dma.done [#allocation6], 512
    $region21: #{_lambda_.3} parent=1 // pred_fallthru
      _
    // Predicated region
    $region22: #{_lambda_.3} parent=1 // pred_check
      _
    $region23: #{_lambda_.3} parent=1 // pred_check_branch
      %52 = sbr.rel (0) target = $region25
    $region24: #{_lambda_.3} parent=1 // pred_region
      %53 = dma.done [#allocation6], 16
    $region25: #{_lambda_.3} parent=1 // pred_fallthru
      _
    %v54 = vld [vmem:[#allocation2] sm:$0xff]
    %v55 = vld [vmem:[#allocation2 + $0x8] sm:$0xff]
    %v56 = vld [vmem:[#allocation5] sm:$0xff]
    %v57 = vld [vmem:[#allocation5 + $0x8] sm:$0xff]
    %v58 = vld [vmem:[#allocation5 + $0x10] sm:$0xff]
    %v59 = vld [vmem:[#allocation5 + $0x18] sm:$0xff]
    %v60 = vld [vmem:[#allocation7] sm:$0x1]
    %v62 = vlaneseq
    %v63 = vshrl.u32 %v62, 7
    %v64 = vsub.s32 0, %v63
    %v65 = vrot.slane %v60, %v64
    %vm67 = vcmask 261120
    %v69 = vsel %vm67, %v54, 0
    %v72 = vsel %vm67, %v55, 0
    %74 = vmatprep.subr.mxu0 0.0
    %75 = vmatpush1.msra.mxu0 %v56
    %76 = vmatprep.subr.mxu0 0.0
    %77 = vmatpush1.msra.mxu0 %v57
    %78 = vmatprep.subr.mxu0 0.0
    %79 = vmatpush1.msra.mxu0 %v58
    %80 = vmatprep.subr.mxu0 0.0
    %81 = vmatpush1.msra.mxu0 %v59
    %82 = vmatprep.subr.mxu0 0.0
    %83 = vmatpush1.msra.mxu0 0.0
    %84 = vmatprep.subr.mxu0 0.0
    %85 = vmatpush1.msra.mxu0 0.0
    %86 = vmatprep.subr.mxu0 0.0
    %87 = vmatpush1.msra.mxu0 0.0
    %88 = vmatprep.subr.mxu0 0.0
    %89 = vmatpush1.msra.mxu0 0.0
    %90 = vmatprep.subr.mxu0 0.0
    %91 = vmatpush1.msra.mxu0 0.0
    %92 = vmatprep.subr.mxu0 0.0
    %93 = vmatpush1.msra.mxu0 0.0
    %94 = vmatprep.subr.mxu0 0.0
    %95 = vmatpush1.msra.mxu0 0.0
    %96 = vmatprep.subr.mxu0 0.0
    %97 = vmatpush1.msra.mxu0 0.0
    %98 = vmatprep.subr.mxu0 0.0
    %99 = vmatpush1.msra.mxu0 0.0
    %100 = vmatprep.subr.mxu0 0.0
    %101 = vmatpush1.msra.mxu0 0.0
    %102 = vmatprep.subr.mxu0 0.0
    %103 = vmatpush1.msra.mxu0 0.0
    %104 = vmatprep.subr.mxu0 0.0
    %105 = vmatpush1.msra.mxu0 0.0
    %106 = vmatprep.subr.mxu0 0.0
    %107 = vmatpush1.msra.mxu0 0.0
    %108 = vmatprep.subr.mxu0 0.0
    %109 = vmatpush1.msra.mxu0 0.0
    %110 = vmatprep.subr.mxu0 0.0
    %111 = vmatpush1.msra.mxu0 0.0
    %112 = vmatprep.subr.mxu0 0.0
    %113 = vmatpush1.msra.mxu0 0.0
    %114 = vmatprep.subr.mxu0 0.0
    %115 = vmatpush1.msra.mxu0 0.0
    %116 = vmatprep.subr.mxu0 0.0
    %117 = vmatpush1.msra.mxu0 0.0
    %118 = vmatprep.subr.mxu0 0.0
    %119 = vmatpush1.msra.mxu0 0.0
    %120 = vmatprep.subr.mxu0 0.0
    %121 = vmatpush1.msra.mxu0 0.0
    %122 = vmatprep.subr.mxu0 0.0
    %123 = vmatpush1.msra.mxu0 0.0
    %124 = vmatprep.subr.mxu0 0.0
    %125 = vmatpush1.msra.mxu0 0.0
    %126 = vmatprep.subr.mxu0 0.0
    %127 = vmatpush1.msra.mxu0 0.0
    %128 = vmatprep.subr.mxu0 0.0
    %129 = vmatpush1.msra.mxu0 0.0
    %130 = vmatprep.subr.mxu0 0.0
    %131 = vmatpush1.msra.mxu0 0.0
    %132 = vmatprep.subr.mxu0 0.0
    %133 = vmatpush1.msra.mxu0 0.0
    %134 = vmatprep.subr.mxu0 0.0
    %135 = vmatpush1.msra.mxu0 0.0
    %136 = vmatprep.subr.mxu0 0.0
    %137 = vmatpush1.msra.mxu0 0.0
    %138 = vmatprep.mubr.f32.mxu0 0.0
    %139 = vmatmul.mubr.f32.gmra.mrb[0].mxu0 %v69
    %v140 = vpop.f32.mrb[0].mxu0
    %v141 = vadd.f32 %v65, %v140
    %v142 = vpop.f32.mrb[0].mxu0
    %143 = vmatprep.mubr.f32.mxu0 0.0
    %144 = vmatmul.mubr.f32.gmra.mrb[0].mxu0 %v72
    %v145 = vpop.f32.mrb[0].mxu0
    %v146 = vadd.f32 %v65, %v145
    %v147 = vpop.f32.mrb[0].mxu0
    %148 = vdwg.mxu0
    %149 = vst [vmem:[#allocation8] sm:$0xff] %v141
    %150 = vst [vmem:[#allocation8 + $0x8] sm:$0xff] %v146
    // Predicated region
    $region26: #{_lambda_.3} parent=1 // pred_check
      _
    $region27: #{_lambda_.3} parent=1 // pred_check_branch
      %152 = sbr.rel (0) target = $region29
    $region28: #{_lambda_.3} parent=1 // pred_region
      %s154 = ssub.s32 256, 256
      %155 = vsyncadd [#allocation4], %s154
      %s156 = sshll.u32 [#allocation8], 4
      %s157 = int_to_ptr.vmem [resolvable:$true] %s156
      %162 = dma.vmem_to_hbm [thread:$0]  %s157, 256, %s3, [#allocation4], 128, 128, 8
    $region29: #{_lambda_.3} parent=1 // pred_fallthru
      _
    // Predicated region
    $region30: #{_lambda_.3} parent=1 // pred_check
      _
    $region31: #{_lambda_.3} parent=1 // pred_check_branch
      %164 = sbr.rel (0) target = $region33
    $region32: #{_lambda_.3} parent=1 // pred_region
      %165 = dma.done [#allocation4], 256
    $region33: #{_lambda_.3} parent=1 // pred_fallthru
      _
    %166 = vsyncpa [#allocation3], 1
    %167 = vsyncpa [#allocation6], 1
    %168 = vsyncpa [#allocation4], 1

// kernel: _lambda_.5
$region0: #{_lambda_.5}
  #allocation0 [shape = 'u32[]', space=smem, size = 0x4, offset = 0x4, fixed_abs, tag = 'smem constant byte address 0x4 - core index']
  #allocation1 [shape = 'u32[144,128]{1,0:T(1,128)}', space=vmem, size = 0x12000, scoped, tag = 'internal scratch']
  %s0 = inlined_call_operand.hbm [shape: f32[16,32], index: 0, kind: input, shape index: {}]
  %s1 = inlined_call_operand.hbm [shape: f32[64,32], index: 1, kind: input, shape index: {}]
  %s2 = inlined_call_operand.hbm [shape: f32[1,64], index: 2, kind: input, shape index: {}]
  %s3 = inlined_call_operand.hbm [shape: f32[16,64], index: 3, kind: output, shape index: {}]
  %s4 = sld [smem:[#allocation0]]
  $region34: #{_lambda_.5} parent=0
    _
  %s6 = ssub.s32 1, %s4
  %s7 = scalar_select 0, %s6, %s4
  $region1: #{_lambda_.5} parent=0
    #allocation2 [shape = 'u8[8192]{0}', space=vmem, size = 0x2000, scoped, tag = 'input window, operand 0, single buffered']
    #allocation3 [shape = 's32[1]{0}', space=sflag, size = 0x4, scoped, tag = 'scoped memory for _lambda_.5']
    #allocation4 [shape = 's32[1]{0}', space=sflag, size = 0x4, scoped, tag = 'scoped memory for _lambda_.5']
    #allocation5 [shape = 'u8[32768]{0}', space=vmem, size = 0x8000, scoped, tag = 'input window, operand 1, single buffered']
    #allocation6 [shape = 's32[1]{0}', space=sflag, size = 0x4, scoped, tag = 'scoped memory for _lambda_.5']
    #allocation7 [shape = 'u8[512]{0}', space=vmem, size = 0x400, scoped, tag = 'input window, operand 2, single buffered']
    #allocation8 [shape = 'u8[8192]{0}', space=vmem, size = 0x2000, scoped, tag = 'output window, operand 0, single buffered']
    %8 = vsyncpa [#allocation3], 0
    %9 = vsyncpa [#allocation6], 0
    %10 = vsyncpa [#allocation4], 0
    // Predicated region
    $region2: #{_lambda_.5} parent=1 // pred_check
      _
    $region3: #{_lambda_.5} parent=1 // pred_check_branch
      %12 = sbr.rel (0) target = $region5
    $region4: #{_lambda_.5} parent=1 // pred_region
      %s14 = ssub.s32 256, 256
      %15 = vsyncadd [#allocation3], %s14
      %s16 = sshll.u32 [#allocation2], 4
      %s17 = int_to_ptr.vmem [resolvable:$true] %s16
      %22 = dma.hbm_to_vmem [thread:$0]  %s0, 256, %s17, [#allocation3], 128, 128, 8
    $region5: #{_lambda_.5} parent=1 // pred_fallthru
      _
    // Predicated region
    $region6: #{_lambda_.5} parent=1 // pred_check
      _
    $region7: #{_lambda_.5} parent=1 // pred_check_branch
      %24 = sbr.rel (0) target = $region9
    $region8: #{_lambda_.5} parent=1 // pred_region
      %s26 = ssub.s32 1024, 1024
      %27 = vsyncadd [#allocation6], %s26
      %s28 = sshll.u32 [#allocation5], 4
      %s29 = int_to_ptr.vmem [resolvable:$true] %s28
      %34 = dma.hbm_to_vmem [thread:$0]  %s1, 1024, %s29, [#allocation6], 128, 128, 8
    $region9: #{_lambda_.5} parent=1 // pred_fallthru
      _
    // Predicated region
    $region10: #{_lambda_.5} parent=1 // pred_check
      _
    $region11: #{_lambda_.5} parent=1 // pred_check_branch
      %36 = sbr.rel (0) target = $region13
    $region12: #{_lambda_.5} parent=1 // pred_region
      %s38 = ssub.s32 16, 16
      %39 = vsyncadd [#allocation6], %s38
      %s41 = sshll.u32 [#allocation7], 4
      %s42 = int_to_ptr.vmem [resolvable:$true] %s41
      %44 = dma.hbm_to_vmem [thread:$0]  %s2, 16, %s42, [#allocation6]
    $region13: #{_lambda_.5} parent=1 // pred_fallthru
      _
    // Predicated region
    $region14: #{_lambda_.5} parent=1 // pred_check
      _
    $region15: #{_lambda_.5} parent=1 // pred_check_branch
      %46 = sbr.rel (0) target = $region17
    $region16: #{_lambda_.5} parent=1 // pred_region
      %47 = dma.done [#allocation3], 256
    $region17: #{_lambda_.5} parent=1 // pred_fallthru
      _
    // Predicated region
    $region18: #{_lambda_.5} parent=1 // pred_check
      _
    $region19: #{_lambda_.5} parent=1 // pred_check_branch
      %49 = sbr.rel (0) target = $region21
    $region20: #{_lambda_.5} parent=1 // pred_region
      %50 = dma.done [#allocation6], 1024
    $region21: #{_lambda_.5} parent=1 // pred_fallthru
      _
    // Predicated region
    $region22: #{_lambda_.5} parent=1 // pred_check
      _
    $region23: #{_lambda_.5} parent=1 // pred_check_branch
      %52 = sbr.rel (0) target = $region25
    $region24: #{_lambda_.5} parent=1 // pred_region
      %53 = dma.done [#allocation6], 16
    $region25: #{_lambda_.5} parent=1 // pred_fallthru
      _
    %v54 = vld [vmem:[#allocation2] sm:$0xff]
    %v55 = vld [vmem:[#allocation2 + $0x8] sm:$0xff]
    %v56 = vld [vmem:[#allocation5] sm:$0xff]
    %v57 = vld [vmem:[#allocation5 + $0x8] sm:$0xff]
    %v58 = vld [vmem:[#allocation5 + $0x10] sm:$0xff]
    %v59 = vld [vmem:[#allocation5 + $0x18] sm:$0xff]
    %v60 = vld [vmem:[#allocation5 + $0x20] sm:$0xff]
    %v61 = vld [vmem:[#allocation5 + $0x28] sm:$0xff]
    %v62 = vld [vmem:[#allocation5 + $0x30] sm:$0xff]
    %v63 = vld [vmem:[#allocation5 + $0x38] sm:$0xff]
    %v64 = vld [vmem:[#allocation7] sm:$0x1]
    %v66 = vlaneseq
    %v67 = vshrl.u32 %v66, 7
    %v68 = vsub.s32 0, %v67
    %v69 = vrot.slane %v64, %v68
    %vm71 = vcmask 261120
    %v73 = vsel %vm71, %v54, 0
    %v76 = vsel %vm71, %v55, 0
    %v79 = vsel %vm71, %v56, 0
    %v82 = vsel %vm71, %v57, 0
    %v85 = vsel %vm71, %v58, 0
    %v88 = vsel %vm71, %v59, 0
    %v91 = vsel %vm71, %v60, 0
    %v94 = vsel %vm71, %v61, 0
    %v97 = vsel %vm71, %v62, 0
    %v100 = vsel %vm71, %v63, 0
    %102 = vmatprep.subr.mxu0 0.0
    %103 = vmatpush1.xpose.msra.mxu0 %v79
    %104 = vmatprep.subr.mxu0 0.0
    %105 = vmatpush1.xpose.msra.mxu0 %v82
    %106 = vmatprep.subr.mxu0 0.0
    %107 = vmatpush1.xpose.msra.mxu0 %v85
    %108 = vmatprep.subr.mxu0 0.0
    %109 = vmatpush1.xpose.msra.mxu0 %v88
    %110 = vmatprep.subr.mxu0 0.0
    %111 = vmatpush1.xpose.msra.mxu0 %v91
    %112 = vmatprep.subr.mxu0 0.0
    %113 = vmatpush1.xpose.msra.mxu0 %v94
    %114 = vmatprep.subr.mxu0 0.0
    %115 = vmatpush1.xpose.msra.mxu0 %v97
    %116 = vmatprep.subr.mxu0 0.0
    %117 = vmatpush1.xpose.msra.mxu0 %v100
    %118 = vmatprep.subr.mxu0 0.0
    %119 = vmatpush1.xpose.msra.mxu0 0.0
    %120 = vmatprep.subr.mxu0 0.0
    %121 = vmatpush1.xpose.msra.mxu0 0.0
    %122 = vmatprep.subr.mxu0 0.0
    %123 = vmatpush1.xpose.msra.mxu0 0.0
    %124 = vmatprep.subr.mxu0 0.0
    %125 = vmatpush1.xpose.msra.mxu0 0.0
    %126 = vmatprep.subr.mxu0 0.0
    %127 = vmatpush1.xpose.msra.mxu0 0.0
    %128 = vmatprep.subr.mxu0 0.0
    %129 = vmatpush1.xpose.msra.mxu0 0.0
    %130 = vmatprep.subr.mxu0 0.0
    %131 = vmatpush1.xpose.msra.mxu0 0.0
    %132 = vmatprep.subr.mxu0 0.0
    %133 = vmatpush1.xpose.msra.mxu0 0.0
    %134 = vmatprep.subr.mxu0 0.0
    %135 = vmatpush1.xpose.msra.mxu0 0.0
    %136 = vmatprep.subr.mxu0 0.0
    %137 = vmatpush1.xpose.msra.mxu0 0.0
    %138 = vmatprep.subr.mxu0 0.0
    %139 = vmatpush1.xpose.msra.mxu0 0.0
    %140 = vmatprep.subr.mxu0 0.0
    %141 = vmatpush1.xpose.msra.mxu0 0.0
    %142 = vmatprep.subr.mxu0 0.0
    %143 = vmatpush1.xpose.msra.mxu0 0.0
    %144 = vmatprep.subr.mxu0 0.0
    %145 = vmatpush1.xpose.msra.mxu0 0.0
    %146 = vmatprep.subr.mxu0 0.0
    %147 = vmatpush1.xpose.msra.mxu0 0.0
    %148 = vmatprep.subr.mxu0 0.0
    %149 = vmatpush1.xpose.msra.mxu0 0.0
    %150 = vmatprep.subr.mxu0 0.0
    %151 = vmatpush1.xpose.msra.mxu0 0.0
    %152 = vmatprep.subr.mxu0 0.0
    %153 = vmatpush1.xpose.msra.mxu0 0.0
    %154 = vmatprep.subr.mxu0 0.0
    %155 = vmatpush1.xpose.msra.mxu0 0.0
    %156 = vmatprep.subr.mxu0 0.0
    %157 = vmatpush1.xpose.msra.mxu0 0.0
    %158 = vmatprep.subr.mxu0 0.0
    %159 = vmatpush1.xpose.msra.mxu0 0.0
    %160 = vmatprep.subr.mxu0 0.0
    %161 = vmatpush1.xpose.msra.mxu0 0.0
    %162 = vmatprep.subr.mxu0 0.0
    %163 = vmatpush1.xpose.msra.mxu0 0.0
    %164 = vmatprep.subr.mxu0 0.0
    %165 = vmatpush1.xpose.msra.mxu0 0.0
    %166 = vmatprep.mubr.f32.mxu0 0.0
    %167 = vmatmul.mubr.f32.gmra.mrb[0].mxu0 %v73
    %v168 = vpop.f32.mrb[0].mxu0
    %v169 = vadd.f32 %v69, %v168
    %v170 = vpop.f32.mrb[0].mxu0
    %171 = vmatprep.mubr.f32.mxu0 0.0
    %172 = vmatmul.mubr.f32.gmra.mrb[0].mxu0 %v76
    %v173 = vpop.f32.mrb[0].mxu0
    %v174 = vadd.f32 %v69, %v173
    %v175 = vpop.f32.mrb[0].mxu0
    %176 = vdwg.mxu0
    %vm177 = vcmask 523264
    %178 = vst.msk [vmem:[#allocation8] sm:$0xff] %vm177, %v169
    %179 = vst.msk [vmem:[#allocation8 + $0x8] sm:$0xff] %vm177, %v174
    // Predicated region
    $region26: #{_lambda_.5} parent=1 // pred_check
      _
    $region27: #{_lambda_.5} parent=1 // pred_check_branch
      %181 = sbr.rel (0) target = $region29
    $region28: #{_lambda_.5} parent=1 // pred_region
      %s183 = ssub.s32 256, 256
      %184 = vsyncadd [#allocation4], %s183
      %s185 = sshll.u32 [#allocation8], 4
      %s186 = int_to_ptr.vmem [resolvable:$true] %s185
      %191 = dma.vmem_to_hbm [thread:$0]  %s186, 256, %s3, [#allocation4], 128, 128, 8
    $region29: #{_lambda_.5} parent=1 // pred_fallthru
      _
    // Predicated region
    $region30: #{_lambda_.5} parent=1 // pred_check
      _
    $region31: #{_lambda_.5} parent=1 // pred_check_branch
      %193 = sbr.rel (0) target = $region33
    $region32: #{_lambda_.5} parent=1 // pred_region
      %194 = dma.done [#allocation4], 256
    $region33: #{_lambda_.5} parent=1 // pred_fallthru
      _
    %195 = vsyncpa [#allocation3], 1
    %196 = vsyncpa [#allocation6], 1
    %197 = vsyncpa [#allocation4], 1

// kernel: _lambda_.4
$region0: #{_lambda_.4}
  #allocation0 [shape = 'u32[]', space=smem, size = 0x4, offset = 0x4, fixed_abs, tag = 'smem constant byte address 0x4 - core index']
  #allocation1 [shape = 'u32[144,128]{1,0:T(1,128)}', space=vmem, size = 0x12000, scoped, tag = 'internal scratch']
  #allocation2 [shape = 'f32[2,32]{1,0:T(2,128)}', space=vmem, size = 0x400, scoped, tag = 'scratch operand']
  #allocation3 [shape = 'f32[2,32]{1,0:T(2,128)}', space=vmem, size = 0x400, scoped, tag = 'scratch operand']
  %s0 = inlined_call_operand.hbm [shape: f32[8,2,128], index: 0, kind: input, shape index: {}]
  %s1 = inlined_call_operand.hbm [shape: f32[32,128], index: 1, kind: input, shape index: {}]
  %s2 = inlined_call_operand.hbm [shape: f32[8,2,32], index: 2, kind: output, shape index: {}]
  %s3 = sld [smem:[#allocation0]]
  $region30: #{_lambda_.4} parent=0
    _
  %s5 = ssub.s32 1, %s3
  %s6 = scalar_select 0, %s5, %s3
  $region1: #{_lambda_.4} parent=0
    #allocation4 [shape = 'u8[8192]{0}', space=vmem, size = 0x2000, scoped, tag = 'input window, operand 0, single buffered']
    #allocation5 [shape = 's32[1]{0}', space=sflag, size = 0x4, scoped, tag = 'scoped memory for _lambda_.4']
    #allocation6 [shape = 's32[1]{0}', space=sflag, size = 0x4, scoped, tag = 'scoped memory for _lambda_.4']
    #allocation7 [shape = 'u8[16384]{0}', space=vmem, size = 0x4000, scoped, tag = 'input window, operand 1, single buffered']
    #allocation8 [shape = 's32[1]{0}', space=sflag, size = 0x4, scoped, tag = 'scoped memory for _lambda_.4']
    #allocation9 [shape = 'u8[8192]{0}', space=vmem, size = 0x2000, scoped, tag = 'output window, operand 0, single buffered']
    %7 = vsyncpa [#allocation5], 0
    %8 = vsyncpa [#allocation8], 0
    %9 = vsyncpa [#allocation6], 0
    // Predicated region
    $region2: #{_lambda_.4} parent=1 // pred_check
      _
    $region3: #{_lambda_.4} parent=1 // pred_check_branch
      %11 = sbr.rel (0) target = $region5
    $region4: #{_lambda_.4} parent=1 // pred_region
      %s13 = ssub.s32 256, 256
      %14 = vsyncadd [#allocation5], %s13
      %s15 = sshll.u32 [#allocation4], 4
      %s16 = int_to_ptr.vmem [resolvable:$true] %s15
      %21 = dma.hbm_to_vmem [thread:$0]  %s0, 256, %s16, [#allocation5], 32, 32, 2
    $region5: #{_lambda_.4} parent=1 // pred_fallthru
      _
    // Predicated region
    $region6: #{_lambda_.4} parent=1 // pred_check
      _
    $region7: #{_lambda_.4} parent=1 // pred_check_branch
      %23 = sbr.rel (0) target = $region9
    $region8: #{_lambda_.4} parent=1 // pred_region
      %s25 = ssub.s32 512, 512
      %26 = vsyncadd [#allocation8], %s25
      %s27 = sshll.u32 [#allocation7], 4
      %s28 = int_to_ptr.vmem [resolvable:$true] %s27
      %33 = dma.hbm_to_vmem [thread:$0]  %s1, 512, %s28, [#allocation8], 128, 128, 8
    $region9: #{_lambda_.4} parent=1 // pred_fallthru
      _
    // Predicated region
    $region10: #{_lambda_.4} parent=1 // pred_check
      _
    $region11: #{_lambda_.4} parent=1 // pred_check_branch
      %35 = sbr.rel (0) target = $region13
    $region12: #{_lambda_.4} parent=1 // pred_region
      %36 = dma.done [#allocation5], 256
    $region13: #{_lambda_.4} parent=1 // pred_fallthru
      _
    // Predicated region
    $region14: #{_lambda_.4} parent=1 // pred_check
      _
    $region15: #{_lambda_.4} parent=1 // pred_check_branch
      %38 = sbr.rel (0) target = $region17
    $region16: #{_lambda_.4} parent=1 // pred_region
      %39 = dma.done [#allocation8], 512
    $region17: #{_lambda_.4} parent=1 // pred_fallthru
      _
    %p40 = scmp.eq.s32.totalorder 0, 0
    // Predicated region
    $region18: #{_lambda_.4} parent=1 // pred_check
      %p41 = pneg %p40
    $region19: #{_lambda_.4} parent=1 // pred_check_branch
      %43 = sbr.rel (%p41) target = $region21
    $region20: #{_lambda_.4} parent=1 // pred_region
      %vm44 = vcmask 254976
      %45 = vst.msk [vmem:[#allocation2] sm:$0x3] %vm44, 0.0
      %46 = vst.msk [vmem:[#allocation3] sm:$0x3] %vm44, 0.0
    $region21: #{_lambda_.4} parent=1 // pred_fallthru
      _
    %v47 = vld [vmem:[#allocation7] sm:$0xff]
    %v48 = vld [vmem:[#allocation7 + $0x8] sm:$0xff]
    %v49 = vld [vmem:[#allocation7 + $0x10] sm:$0xff]
    %v50 = vld [vmem:[#allocation7 + $0x18] sm:$0xff]
    %v51 = vld [vmem:[#allocation2] sm:$0x3]
    %v52 = vld [vmem:[#allocation3] sm:$0x3]
    %vm53 = vcmask 261120
    %v55 = vsel %vm53, %v51, 0
    %57 = vmatprep.subr.mxu0 0.0
    %58 = vmatpush1.msra.mxu0 %v47
    %59 = vmatprep.subr.mxu0 0.0
    %60 = vmatpush1.msra.mxu0 %v48
    %61 = vmatprep.subr.mxu0 0.0
    %62 = vmatpush1.msra.mxu0 %v49
    %63 = vmatprep.subr.mxu0 0.0
    %64 = vmatpush1.msra.mxu0 %v50
    %65 = vmatprep.subr.mxu0 0.0
    %66 = vmatpush1.msra.mxu0 0.0
    %67 = vmatprep.subr.mxu0 0.0
    %68 = vmatpush1.msra.mxu0 0.0
    %69 = vmatprep.subr.mxu0 0.0
    %70 = vmatpush1.msra.mxu0 0.0
    %71 = vmatprep.subr.mxu0 0.0
    %72 = vmatpush1.msra.mxu0 0.0
    %73 = vmatprep.subr.mxu0 0.0
    %74 = vmatpush1.msra.mxu0 0.0
    %75 = vmatprep.subr.mxu0 0.0
    %76 = vmatpush1.msra.mxu0 0.0
    %77 = vmatprep.subr.mxu0 0.0
    %78 = vmatpush1.msra.mxu0 0.0
    %79 = vmatprep.subr.mxu0 0.0
    %80 = vmatpush1.msra.mxu0 0.0
    %81 = vmatprep.subr.mxu0 0.0
    %82 = vmatpush1.msra.mxu0 0.0
    %83 = vmatprep.subr.mxu0 0.0
    %84 = vmatpush1.msra.mxu0 0.0
    %85 = vmatprep.subr.mxu0 0.0
    %86 = vmatpush1.msra.mxu0 0.0
    %87 = vmatprep.subr.mxu0 0.0
    %88 = vmatpush1.msra.mxu0 0.0
    %89 = vmatprep.subr.mxu0 0.0
    %90 = vmatpush1.msra.mxu0 0.0
    %91 = vmatprep.subr.mxu0 0.0
    %92 = vmatpush1.msra.mxu0 0.0
    %93 = vmatprep.subr.mxu0 0.0
    %94 = vmatpush1.msra.mxu0 0.0
    %95 = vmatprep.subr.mxu0 0.0
    %96 = vmatpush1.msra.mxu0 0.0
    %97 = vmatprep.subr.mxu0 0.0
    %98 = vmatpush1.msra.mxu0 0.0
    %99 = vmatprep.subr.mxu0 0.0
    %100 = vmatpush1.msra.mxu0 0.0
    %101 = vmatprep.subr.mxu0 0.0
    %102 = vmatpush1.msra.mxu0 0.0
    %103 = vmatprep.subr.mxu0 0.0
    %104 = vmatpush1.msra.mxu0 0.0
    %105 = vmatprep.subr.mxu0 0.0
    %106 = vmatpush1.msra.mxu0 0.0
    %107 = vmatprep.subr.mxu0 0.0
    %108 = vmatpush1.msra.mxu0 0.0
    %109 = vmatprep.subr.mxu0 0.0
    %110 = vmatpush1.msra.mxu0 0.0
    %111 = vmatprep.subr.mxu0 0.0
    %112 = vmatpush1.msra.mxu0 0.0
    %113 = vmatprep.subr.mxu0 0.0
    %114 = vmatpush1.msra.mxu0 0.0
    %115 = vmatprep.subr.mxu0 0.0
    %116 = vmatpush1.msra.mxu0 0.0
    %117 = vmatprep.subr.mxu0 0.0
    %118 = vmatpush1.msra.mxu0 0.0
    %119 = vmatprep.subr.mxu0 0.0
    %120 = vmatpush1.msra.mxu0 0.0
    %121 = vmatprep.mubr.f32.mxu0 0.0
    %122 = vmatmul.mubr.f32.gmra.mrb[0].mxu0 %v55
    %v123 = vpop.f32.mrb[0].mxu0
    %v124 = vadd.f32 0.0, %v123
    %v125 = vpop.f32.mrb[0].mxu0
    %126 = vdwg.mxu0
    %v127 = vld [vmem:[#allocation4] sm:$0x3]
    %v128 = vadd.f32 %v127, %v124
    %v129 = vxor.u32 %v128, 2147483648
    %v130 = vmul.f32 %v129, 1.442695
    %v131 = vpow.pop %v130
    %v132 = vadd.f32 %v131, 1.0
    %v133 = vrcp.pop %v132
    %v134 = vmul.f32 1.0, %v133
    %v135 = vtanh.pop %v128
    %137 = vrot.lane.b32.xlu0 %v52, 32
    %v138 = vpop.permute.xlu0 %137
    %v140 = vmul.f32 %v134, %v138
    %142 = vrot.lane.b32.xlu0 %v135, 32
    %v143 = vpop.permute.xlu0 %142
    %v145 = vmul.f32 %v134, %v143
    %147 = vrot.lane.b32.xlu0 %v145, 32
    %v148 = vpop.permute.xlu0 %147
    %v150 = vadd.f32 %v140, %v148
    %v151 = vtanh.pop %v150
    %153 = vrot.lane.b32.xlu0 %v151, 32
    %v154 = vpop.permute.xlu0 %153
    %v156 = vmul.f32 %v134, %v154
    %158 = vrot.lane.b32.xlu0 %v156, 64
    %v159 = vpop.permute.xlu0 %158
    %vm161 = vcmask 254976
    %162 = vst.msk [vmem:[#allocation9] sm:$0x3] %vm161, %v159
    %v163 = vsel %vm53, %v159, 0
    %165 = vmatprep.subr.mxu0 0.0
    %166 = vmatpush1.msra.mxu0 %v47
    %167 = vmatprep.subr.mxu0 0.0
    %168 = vmatpush1.msra.mxu0 %v48
    %169 = vmatprep.subr.mxu0 0.0
    %170 = vmatpush1.msra.mxu0 %v49
    %171 = vmatprep.subr.mxu0 0.0
    %172 = vmatpush1.msra.mxu0 %v50
    %173 = vmatprep.subr.mxu0 0.0
    %174 = vmatpush1.msra.mxu0 0.0
    %175 = vmatprep.subr.mxu0 0.0
    %176 = vmatpush1.msra.mxu0 0.0
    %177 = vmatprep.subr.mxu0 0.0
    %178 = vmatpush1.msra.mxu0 0.0
    %179 = vmatprep.subr.mxu0 0.0
    %180 = vmatpush1.msra.mxu0 0.0
    %181 = vmatprep.subr.mxu0 0.0
    %182 = vmatpush1.msra.mxu0 0.0
    %183 = vmatprep.subr.mxu0 0.0
    %184 = vmatpush1.msra.mxu0 0.0
    %185 = vmatprep.subr.mxu0 0.0
    %186 = vmatpush1.msra.mxu0 0.0
    %187 = vmatprep.subr.mxu0 0.0
    %188 = vmatpush1.msra.mxu0 0.0
    %189 = vmatprep.subr.mxu0 0.0
    %190 = vmatpush1.msra.mxu0 0.0
    %191 = vmatprep.subr.mxu0 0.0
    %192 = vmatpush1.msra.mxu0 0.0
    %193 = vmatprep.subr.mxu0 0.0
    %194 = vmatpush1.msra.mxu0 0.0
    %195 = vmatprep.subr.mxu0 0.0
    %196 = vmatpush1.msra.mxu0 0.0
    %197 = vmatprep.subr.mxu0 0.0
    %198 = vmatpush1.msra.mxu0 0.0
    %199 = vmatprep.subr.mxu0 0.0
    %200 = vmatpush1.msra.mxu0 0.0
    %201 = vmatprep.subr.mxu0 0.0
    %202 = vmatpush1.msra.mxu0 0.0
    %203 = vmatprep.subr.mxu0 0.0
    %204 = vmatpush1.msra.mxu0 0.0
    %205 = vmatprep.subr.mxu0 0.0
    %206 = vmatpush1.msra.mxu0 0.0
    %207 = vmatprep.subr.mxu0 0.0
    %208 = vmatpush1.msra.mxu0 0.0
    %209 = vmatprep.subr.mxu0 0.0
    %210 = vmatpush1.msra.mxu0 0.0
    %211 = vmatprep.subr.mxu0 0.0
    %212 = vmatpush1.msra.mxu0 0.0
    %213 = vmatprep.subr.mxu0 0.0
    %214 = vmatpush1.msra.mxu0 0.0
    %215 = vmatprep.subr.mxu0 0.0
    %216 = vmatpush1.msra.mxu0 0.0
    %217 = vmatprep.subr.mxu0 0.0
    %218 = vmatpush1.msra.mxu0 0.0
    %219 = vmatprep.subr.mxu0 0.0
    %220 = vmatpush1.msra.mxu0 0.0
    %221 = vmatprep.subr.mxu0 0.0
    %222 = vmatpush1.msra.mxu0 0.0
    %223 = vmatprep.subr.mxu0 0.0
    %224 = vmatpush1.msra.mxu0 0.0
    %225 = vmatprep.subr.mxu0 0.0
    %226 = vmatpush1.msra.mxu0 0.0
    %227 = vmatprep.subr.mxu0 0.0
    %228 = vmatpush1.msra.mxu0 0.0
    %229 = vmatprep.mubr.f32.mxu0 0.0
    %230 = vmatmul.mubr.f32.gmra.mrb[0].mxu0 %v163
    %v231 = vpop.f32.mrb[0].mxu0
    %v232 = vadd.f32 0.0, %v231
    %v233 = vpop.f32.mrb[0].mxu0
    %234 = vdwg.mxu0
    %s235 = scalar_lea.vmem [#allocation4], 2
    %v236 = vld [vmem:[%s235] sm:$0x3]
    %v237 = vadd.f32 %v236, %v232
    %v238 = vxor.u32 %v237, 2147483648
    %v239 = vmul.f32 %v238, 1.442695
    %v240 = vpow.pop %v239
    %v241 = vadd.f32 %v240, 1.0
    %v242 = vrcp.pop %v241
    %v243 = vmul.f32 1.0, %v242
    %v244 = vtanh.pop %v237
    %v245 = vmul.f32 %v243, %v150
    %247 = vrot.lane.b32.xlu0 %v244, 32
    %v248 = vpop.permute.xlu0 %247
    %v250 = vmul.f32 %v243, %v248
    %252 = vrot.lane.b32.xlu0 %v250, 32
    %v253 = vpop.permute.xlu0 %252
    %v255 = vadd.f32 %v245, %v253
    %v256 = vtanh.pop %v255
    %258 = vrot.lane.b32.xlu0 %v256, 32
    %v259 = vpop.permute.xlu0 %258
    %v261 = vmul.f32 %v243, %v259
    %263 = vrot.lane.b32.xlu0 %v261, 64
    %v264 = vpop.permute.xlu0 %263
    %s266 = scalar_lea.vmem [#allocation9], 2
    %267 = vst.msk [vmem:[%s266] sm:$0x3] %vm161, %v264
    %v268 = vsel %vm53, %v264, 0
    %270 = vmatprep.subr.mxu0 0.0
    %271 = vmatpush1.msra.mxu0 %v47
    %272 = vmatprep.subr.mxu0 0.0
    %273 = vmatpush1.msra.mxu0 %v48
    %274 = vmatprep.subr.mxu0 0.0
    %275 = vmatpush1.msra.mxu0 %v49
    %276 = vmatprep.subr.mxu0 0.0
    %277 = vmatpush1.msra.mxu0 %v50
    %278 = vmatprep.subr.mxu0 0.0
    %279 = vmatpush1.msra.mxu0 0.0
    %280 = vmatprep.subr.mxu0 0.0
    %281 = vmatpush1.msra.mxu0 0.0
    %282 = vmatprep.subr.mxu0 0.0
    %283 = vmatpush1.msra.mxu0 0.0
    %284 = vmatprep.subr.mxu0 0.0
    %285 = vmatpush1.msra.mxu0 0.0
    %286 = vmatprep.subr.mxu0 0.0
    %287 = vmatpush1.msra.mxu0 0.0
    %288 = vmatprep.subr.mxu0 0.0
    %289 = vmatpush1.msra.mxu0 0.0
    %290 = vmatprep.subr.mxu0 0.0
    %291 = vmatpush1.msra.mxu0 0.0
    %292 = vmatprep.subr.mxu0 0.0
    %293 = vmatpush1.msra.mxu0 0.0
    %294 = vmatprep.subr.mxu0 0.0
    %295 = vmatpush1.msra.mxu0 0.0
    %296 = vmatprep.subr.mxu0 0.0
    %297 = vmatpush1.msra.mxu0 0.0
    %298 = vmatprep.subr.mxu0 0.0
    %299 = vmatpush1.msra.mxu0 0.0
    %300 = vmatprep.subr.mxu0 0.0
    %301 = vmatpush1.msra.mxu0 0.0
    %302 = vmatprep.subr.mxu0 0.0
    %303 = vmatpush1.msra.mxu0 0.0
    %304 = vmatprep.subr.mxu0 0.0
    %305 = vmatpush1.msra.mxu0 0.0
    %306 = vmatprep.subr.mxu0 0.0
    %307 = vmatpush1.msra.mxu0 0.0
    %308 = vmatprep.subr.mxu0 0.0
    %309 = vmatpush1.msra.mxu0 0.0
    %310 = vmatprep.subr.mxu0 0.0
    %311 = vmatpush1.msra.mxu0 0.0
    %312 = vmatprep.subr.mxu0 0.0
    %313 = vmatpush1.msra.mxu0 0.0
    %314 = vmatprep.subr.mxu0 0.0
    %315 = vmatpush1.msra.mxu0 0.0
    %316 = vmatprep.subr.mxu0 0.0
    %317 = vmatpush1.msra.mxu0 0.0
    %318 = vmatprep.subr.mxu0 0.0
    %319 = vmatpush1.msra.mxu0 0.0
    %320 = vmatprep.subr.mxu0 0.0
    %321 = vmatpush1.msra.mxu0 0.0
    %322 = vmatprep.subr.mxu0 0.0
    %323 = vmatpush1.msra.mxu0 0.0
    %324 = vmatprep.subr.mxu0 0.0
    %325 = vmatpush1.msra.mxu0 0.0
    %326 = vmatprep.subr.mxu0 0.0
    %327 = vmatpush1.msra.mxu0 0.0
    %328 = vmatprep.subr.mxu0 0.0
    %329 = vmatpush1.msra.mxu0 0.0
    %330 = vmatprep.subr.mxu0 0.0
    %331 = vmatpush1.msra.mxu0 0.0
    %332 = vmatprep.subr.mxu0 0.0
    %333 = vmatpush1.msra.mxu0 0.0
    %334 = vmatprep.mubr.f32.mxu0 0.0
    %335 = vmatmul.mubr.f32.gmra.mrb[0].mxu0 %v268
    %v336 = vpop.f32.mrb[0].mxu0
    %v337 = vadd.f32 0.0, %v336
    %v338 = vpop.f32.mrb[0].mxu0
    %339 = vdwg.mxu0
    %s340 = scalar_lea.vmem [#allocation4], 4
    %v341 = vld [vmem:[%s340] sm:$0x3]
    %v342 = vadd.f32 %v341, %v337
    %v343 = vxor.u32 %v342, 2147483648
    %v344 = vmul.f32 %v343, 1.442695
    %v345 = vpow.pop %v344
    %v346 = vadd.f32 %v345, 1.0
    %v347 = vrcp.pop %v346
    %v348 = vmul.f32 1.0, %v347
    %v349 = vtanh.pop %v342
    %v350 = vmul.f32 %v348, %v255
    %352 = vrot.lane.b32.xlu0 %v349, 32
    %v353 = vpop.permute.xlu0 %352
    %v355 = vmul.f32 %v348, %v353
    %357 = vrot.lane.b32.xlu0 %v355, 32
    %v358 = vpop.permute.xlu0 %357
    %v360 = vadd.f32 %v350, %v358
    %v361 = vtanh.pop %v360
    %363 = vrot.lane.b32.xlu0 %v361, 32
    %v364 = vpop.permute.xlu0 %363
    %v366 = vmul.f32 %v348, %v364
    %368 = vrot.lane.b32.xlu0 %v366, 64
    %v369 = vpop.permute.xlu0 %368
    %s371 = scalar_lea.vmem [#allocation9], 4
    %372 = vst.msk [vmem:[%s371] sm:$0x3] %vm161, %v369
    %v373 = vsel %vm53, %v369, 0
    %375 = vmatprep.subr.mxu0 0.0
    %376 = vmatpush1.msra.mxu0 %v47
    %377 = vmatprep.subr.mxu0 0.0
    %378 = vmatpush1.msra.mxu0 %v48
    %379 = vmatprep.subr.mxu0 0.0
    %380 = vmatpush1.msra.mxu0 %v49
    %381 = vmatprep.subr.mxu0 0.0
    %382 = vmatpush1.msra.mxu0 %v50
    %383 = vmatprep.subr.mxu0 0.0
    %384 = vmatpush1.msra.mxu0 0.0
    %385 = vmatprep.subr.mxu0 0.0
    %386 = vmatpush1.msra.mxu0 0.0
    %387 = vmatprep.subr.mxu0 0.0
    %388 = vmatpush1.msra.mxu0 0.0
    %389 = vmatprep.subr.mxu0 0.0
    %390 = vmatpush1.msra.mxu0 0.0
    %391 = vmatprep.subr.mxu0 0.0
    %392 = vmatpush1.msra.mxu0 0.0
    %393 = vmatprep.subr.mxu0 0.0
    %394 = vmatpush1.msra.mxu0 0.0
    %395 = vmatprep.subr.mxu0 0.0
    %396 = vmatpush1.msra.mxu0 0.0
    %397 = vmatprep.subr.mxu0 0.0
    %398 = vmatpush1.msra.mxu0 0.0
    %399 = vmatprep.subr.mxu0 0.0
    %400 = vmatpush1.msra.mxu0 0.0
    %401 = vmatprep.subr.mxu0 0.0
    %402 = vmatpush1.msra.mxu0 0.0
    %403 = vmatprep.subr.mxu0 0.0
    %404 = vmatpush1.msra.mxu0 0.0
    %405 = vmatprep.subr.mxu0 0.0
    %406 = vmatpush1.msra.mxu0 0.0
    %407 = vmatprep.subr.mxu0 0.0
    %408 = vmatpush1.msra.mxu0 0.0
    %409 = vmatprep.subr.mxu0 0.0
    %410 = vmatpush1.msra.mxu0 0.0
    %411 = vmatprep.subr.mxu0 0.0
    %412 = vmatpush1.msra.mxu0 0.0
    %413 = vmatprep.subr.mxu0 0.0
    %414 = vmatpush1.msra.mxu0 0.0
    %415 = vmatprep.subr.mxu0 0.0
    %416 = vmatpush1.msra.mxu0 0.0
    %417 = vmatprep.subr.mxu0 0.0
    %418 = vmatpush1.msra.mxu0 0.0
    %419 = vmatprep.subr.mxu0 0.0
    %420 = vmatpush1.msra.mxu0 0.0
    %421 = vmatprep.subr.mxu0 0.0
    %422 = vmatpush1.msra.mxu0 0.0
    %423 = vmatprep.subr.mxu0 0.0
    %424 = vmatpush1.msra.mxu0 0.0
    %425 = vmatprep.subr.mxu0 0.0
    %426 = vmatpush1.msra.mxu0 0.0
    %427 = vmatprep.subr.mxu0 0.0
    %428 = vmatpush1.msra.mxu0 0.0
    %429 = vmatprep.subr.mxu0 0.0
    %430 = vmatpush1.msra.mxu0 0.0
    %431 = vmatprep.subr.mxu0 0.0
    %432 = vmatpush1.msra.mxu0 0.0
    %433 = vmatprep.subr.mxu0 0.0
    %434 = vmatpush1.msra.mxu0 0.0
    %435 = vmatprep.subr.mxu0 0.0
    %436 = vmatpush1.msra.mxu0 0.0
    %437 = vmatprep.subr.mxu0 0.0
    %438 = vmatpush1.msra.mxu0 0.0
    %439 = vmatprep.mubr.f32.mxu0 0.0
    %440 = vmatmul.mubr.f32.gmra.mrb[0].mxu0 %v373
    %v441 = vpop.f32.mrb[0].mxu0
    %v442 = vadd.f32 0.0, %v441
    %v443 = vpop.f32.mrb[0].mxu0
    %444 = vdwg.mxu0
    %s445 = scalar_lea.vmem [#allocation4], 6
    %v446 = vld [vmem:[%s445] sm:$0x3]
    %v447 = vadd.f32 %v446, %v442
    %v448 = vxor.u32 %v447, 2147483648
    %v449 = vmul.f32 %v448, 1.442695
    %v450 = vpow.pop %v449
    %v451 = vadd.f32 %v450, 1.0
    %v452 = vrcp.pop %v451
    %v453 = vmul.f32 1.0, %v452
    %v454 = vtanh.pop %v447
    %v455 = vmul.f32 %v453, %v360
    %457 = vrot.lane.b32.xlu0 %v454, 32
    %v458 = vpop.permute.xlu0 %457
    %v460 = vmul.f32 %v453, %v458
    %462 = vrot.lane.b32.xlu0 %v460, 32
    %v463 = vpop.permute.xlu0 %462
    %v465 = vadd.f32 %v455, %v463
    %v466 = vtanh.pop %v465
    %468 = vrot.lane.b32.xlu0 %v466, 32
    %v469 = vpop.permute.xlu0 %468
    %v471 = vmul.f32 %v453, %v469
    %473 = vrot.lane.b32.xlu0 %v471, 64
    %v474 = vpop.permute.xlu0 %473
    %s476 = scalar_lea.vmem [#allocation9], 6
    %477 = vst.msk [vmem:[%s476] sm:$0x3] %vm161, %v474
    %v478 = vsel %vm53, %v474, 0
    %480 = vmatprep.subr.mxu0 0.0
    %481 = vmatpush1.msra.mxu0 %v47
    %482 = vmatprep.subr.mxu0 0.0
    %483 = vmatpush1.msra.mxu0 %v48
    %484 = vmatprep.subr.mxu0 0.0
    %485 = vmatpush1.msra.mxu0 %v49
    %486 = vmatprep.subr.mxu0 0.0
    %487 = vmatpush1.msra.mxu0 %v50
    %488 = vmatprep.subr.mxu0 0.0
    %489 = vmatpush1.msra.mxu0 0.0
    %490 = vmatprep.subr.mxu0 0.0
    %491 = vmatpush1.msra.mxu0 0.0
    %492 = vmatprep.subr.mxu0 0.0
    %493 = vmatpush1.msra.mxu0 0.0
    %494 = vmatprep.subr.mxu0 0.0
    %495 = vmatpush1.msra.mxu0 0.0
    %496 = vmatprep.subr.mxu0 0.0
    %497 = vmatpush1.msra.mxu0 0.0
    %498 = vmatprep.subr.mxu0 0.0
    %499 = vmatpush1.msra.mxu0 0.0
    %500 = vmatprep.subr.mxu0 0.0
    %501 = vmatpush1.msra.mxu0 0.0
    %502 = vmatprep.subr.mxu0 0.0
    %503 = vmatpush1.msra.mxu0 0.0
    %504 = vmatprep.subr.mxu0 0.0
    %505 = vmatpush1.msra.mxu0 0.0
    %506 = vmatprep.subr.mxu0 0.0
    %507 = vmatpush1.msra.mxu0 0.0
    %508 = vmatprep.subr.mxu0 0.0
    %509 = vmatpush1.msra.mxu0 0.0
    %510 = vmatprep.subr.mxu0 0.0
    %511 = vmatpush1.msra.mxu0 0.0
    %512 = vmatprep.subr.mxu0 0.0
    %513 = vmatpush1.msra.mxu0 0.0
    %514 = vmatprep.subr.mxu0 0.0
    %515 = vmatpush1.msra.mxu0 0.0
    %516 = vmatprep.subr.mxu0 0.0
    %517 = vmatpush1.msra.mxu0 0.0
    %518 = vmatprep.subr.mxu0 0.0
    %519 = vmatpush1.msra.mxu0 0.0
    %520 = vmatprep.subr.mxu0 0.0
    %521 = vmatpush1.msra.mxu0 0.0
    %522 = vmatprep.subr.mxu0 0.0
    %523 = vmatpush1.msra.mxu0 0.0
    %524 = vmatprep.subr.mxu0 0.0
    %525 = vmatpush1.msra.mxu0 0.0
    %526 = vmatprep.subr.mxu0 0.0
    %527 = vmatpush1.msra.mxu0 0.0
    %528 = vmatprep.subr.mxu0 0.0
    %529 = vmatpush1.msra.mxu0 0.0
    %530 = vmatprep.subr.mxu0 0.0
    %531 = vmatpush1.msra.mxu0 0.0
    %532 = vmatprep.subr.mxu0 0.0
    %533 = vmatpush1.msra.mxu0 0.0
    %534 = vmatprep.subr.mxu0 0.0
    %535 = vmatpush1.msra.mxu0 0.0
    %536 = vmatprep.subr.mxu0 0.0
    %537 = vmatpush1.msra.mxu0 0.0
    %538 = vmatprep.subr.mxu0 0.0
    %539 = vmatpush1.msra.mxu0 0.0
    %540 = vmatprep.subr.mxu0 0.0
    %541 = vmatpush1.msra.mxu0 0.0
    %542 = vmatprep.subr.mxu0 0.0
    %543 = vmatpush1.msra.mxu0 0.0
    %544 = vmatprep.mubr.f32.mxu0 0.0
    %545 = vmatmul.mubr.f32.gmra.mrb[0].mxu0 %v478
    %v546 = vpop.f32.mrb[0].mxu0
    %v547 = vadd.f32 0.0, %v546
    %v548 = vpop.f32.mrb[0].mxu0
    %549 = vdwg.mxu0
    %s550 = scalar_lea.vmem [#allocation4], 8
    %v551 = vld [vmem:[%s550] sm:$0x3]
    %v552 = vadd.f32 %v551, %v547
    %v553 = vxor.u32 %v552, 2147483648
    %v554 = vmul.f32 %v553, 1.442695
    %v555 = vpow.pop %v554
    %v556 = vadd.f32 %v555, 1.0
    %v557 = vrcp.pop %v556
    %v558 = vmul.f32 1.0, %v557
    %v559 = vtanh.pop %v552
    %v560 = vmul.f32 %v558, %v465
    %562 = vrot.lane.b32.xlu0 %v559, 32
    %v563 = vpop.permute.xlu0 %562
    %v565 = vmul.f32 %v558, %v563
    %567 = vrot.lane.b32.xlu0 %v565, 32
    %v568 = vpop.permute.xlu0 %567
    %v570 = vadd.f32 %v560, %v568
    %v571 = vtanh.pop %v570
    %573 = vrot.lane.b32.xlu0 %v571, 32
    %v574 = vpop.permute.xlu0 %573
    %v576 = vmul.f32 %v558, %v574
    %578 = vrot.lane.b32.xlu0 %v576, 64
    %v579 = vpop.permute.xlu0 %578
    %s581 = scalar_lea.vmem [#allocation9], 8
    %582 = vst.msk [vmem:[%s581] sm:$0x3] %vm161, %v579
    %v583 = vsel %vm53, %v579, 0
    %585 = vmatprep.subr.mxu0 0.0
    %586 = vmatpush1.msra.mxu0 %v47
    %587 = vmatprep.subr.mxu0 0.0
    %588 = vmatpush1.msra.mxu0 %v48
    %589 = vmatprep.subr.mxu0 0.0
    %590 = vmatpush1.msra.mxu0 %v49
    %591 = vmatprep.subr.mxu0 0.0
    %592 = vmatpush1.msra.mxu0 %v50
    %593 = vmatprep.subr.mxu0 0.0
    %594 = vmatpush1.msra.mxu0 0.0
    %595 = vmatprep.subr.mxu0 0.0
    %596 = vmatpush1.msra.mxu0 0.0
    %597 = vmatprep.subr.mxu0 0.0
    %598 = vmatpush1.msra.mxu0 0.0
    %599 = vmatprep.subr.mxu0 0.0
    %600 = vmatpush1.msra.mxu0 0.0
    %601 = vmatprep.subr.mxu0 0.0
    %602 = vmatpush1.msra.mxu0 0.0
    %603 = vmatprep.subr.mxu0 0.0
    %604 = vmatpush1.msra.mxu0 0.0
    %605 = vmatprep.subr.mxu0 0.0
    %606 = vmatpush1.msra.mxu0 0.0
    %607 = vmatprep.subr.mxu0 0.0
    %608 = vmatpush1.msra.mxu0 0.0
    %609 = vmatprep.subr.mxu0 0.0
    %610 = vmatpush1.msra.mxu0 0.0
    %611 = vmatprep.subr.mxu0 0.0
    %612 = vmatpush1.msra.mxu0 0.0
    %613 = vmatprep.subr.mxu0 0.0
    %614 = vmatpush1.msra.mxu0 0.0
    %615 = vmatprep.subr.mxu0 0.0
    %616 = vmatpush1.msra.mxu0 0.0
    %617 = vmatprep.subr.mxu0 0.0
    %618 = vmatpush1.msra.mxu0 0.0
    %619 = vmatprep.subr.mxu0 0.0
    %620 = vmatpush1.msra.mxu0 0.0
    %621 = vmatprep.subr.mxu0 0.0
    %622 = vmatpush1.msra.mxu0 0.0
    %623 = vmatprep.subr.mxu0 0.0
    %624 = vmatpush1.msra.mxu0 0.0
    %625 = vmatprep.subr.mxu0 0.0
    %626 = vmatpush1.msra.mxu0 0.0
    %627 = vmatprep.subr.mxu0 0.0
    %628 = vmatpush1.msra.mxu0 0.0
    %629 = vmatprep.subr.mxu0 0.0
    %630 = vmatpush1.msra.mxu0 0.0
    %631 = vmatprep.subr.mxu0 0.0
    %632 = vmatpush1.msra.mxu0 0.0
    %633 = vmatprep.subr.mxu0 0.0
    %634 = vmatpush1.msra.mxu0 0.0
    %635 = vmatprep.subr.mxu0 0.0
    %636 = vmatpush1.msra.mxu0 0.0
    %637 = vmatprep.subr.mxu0 0.0
    %638 = vmatpush1.msra.mxu0 0.0
    %639 = vmatprep.subr.mxu0 0.0
    %640 = vmatpush1.msra.mxu0 0.0
    %641 = vmatprep.subr.mxu0 0.0
    %642 = vmatpush1.msra.mxu0 0.0
    %643 = vmatprep.subr.mxu0 0.0
    %644 = vmatpush1.msra.mxu0 0.0
    %645 = vmatprep.subr.mxu0 0.0
    %646 = vmatpush1.msra.mxu0 0.0
    %647 = vmatprep.subr.mxu0 0.0
    %648 = vmatpush1.msra.mxu0 0.0
    %649 = vmatprep.mubr.f32.mxu0 0.0
    %650 = vmatmul.mubr.f32.gmra.mrb[0].mxu0 %v583
    %v651 = vpop.f32.mrb[0].mxu0
    %v652 = vadd.f32 0.0, %v651
    %v653 = vpop.f32.mrb[0].mxu0
    %654 = vdwg.mxu0
    %s655 = scalar_lea.vmem [#allocation4], 10
    %v656 = vld [vmem:[%s655] sm:$0x3]
    %v657 = vadd.f32 %v656, %v652
    %v658 = vxor.u32 %v657, 2147483648
    %v659 = vmul.f32 %v658, 1.442695
    %v660 = vpow.pop %v659
    %v661 = vadd.f32 %v660, 1.0
    %v662 = vrcp.pop %v661
    %v663 = vmul.f32 1.0, %v662
    %v664 = vtanh.pop %v657
    %v665 = vmul.f32 %v663, %v570
    %667 = vrot.lane.b32.xlu0 %v664, 32
    %v668 = vpop.permute.xlu0 %667
    %v670 = vmul.f32 %v663, %v668
    %672 = vrot.lane.b32.xlu0 %v670, 32
    %v673 = vpop.permute.xlu0 %672
    %v675 = vadd.f32 %v665, %v673
    %v676 = vtanh.pop %v675
    %678 = vrot.lane.b32.xlu0 %v676, 32
    %v679 = vpop.permute.xlu0 %678
    %v681 = vmul.f32 %v663, %v679
    %683 = vrot.lane.b32.xlu0 %v681, 64
    %v684 = vpop.permute.xlu0 %683
    %s686 = scalar_lea.vmem [#allocation9], 10
    %687 = vst.msk [vmem:[%s686] sm:$0x3] %vm161, %v684
    %v688 = vsel %vm53, %v684, 0
    %690 = vmatprep.subr.mxu0 0.0
    %691 = vmatpush1.msra.mxu0 %v47
    %692 = vmatprep.subr.mxu0 0.0
    %693 = vmatpush1.msra.mxu0 %v48
    %694 = vmatprep.subr.mxu0 0.0
    %695 = vmatpush1.msra.mxu0 %v49
    %696 = vmatprep.subr.mxu0 0.0
    %697 = vmatpush1.msra.mxu0 %v50
    %698 = vmatprep.subr.mxu0 0.0
    %699 = vmatpush1.msra.mxu0 0.0
    %700 = vmatprep.subr.mxu0 0.0
    %701 = vmatpush1.msra.mxu0 0.0
    %702 = vmatprep.subr.mxu0 0.0
    %703 = vmatpush1.msra.mxu0 0.0
    %704 = vmatprep.subr.mxu0 0.0
    %705 = vmatpush1.msra.mxu0 0.0
    %706 = vmatprep.subr.mxu0 0.0
    %707 = vmatpush1.msra.mxu0 0.0
    %708 = vmatprep.subr.mxu0 0.0
    %709 = vmatpush1.msra.mxu0 0.0
    %710 = vmatprep.subr.mxu0 0.0
    %711 = vmatpush1.msra.mxu0 0.0
    %712 = vmatprep.subr.mxu0 0.0
    %713 = vmatpush1.msra.mxu0 0.0
    %714 = vmatprep.subr.mxu0 0.0
    %715 = vmatpush1.msra.mxu0 0.0
    %716 = vmatprep.subr.mxu0 0.0
    %717 = vmatpush1.msra.mxu0 0.0
    %718 = vmatprep.subr.mxu0 0.0
    %719 = vmatpush1.msra.mxu0 0.0
    %720 = vmatprep.subr.mxu0 0.0
    %721 = vmatpush1.msra.mxu0 0.0
    %722 = vmatprep.subr.mxu0 0.0
    %723 = vmatpush1.msra.mxu0 0.0
    %724 = vmatprep.subr.mxu0 0.0
    %725 = vmatpush1.msra.mxu0 0.0
    %726 = vmatprep.subr.mxu0 0.0
    %727 = vmatpush1.msra.mxu0 0.0
    %728 = vmatprep.subr.mxu0 0.0
    %729 = vmatpush1.msra.mxu0 0.0
    %730 = vmatprep.subr.mxu0 0.0
    %731 = vmatpush1.msra.mxu0 0.0
    %732 = vmatprep.subr.mxu0 0.0
    %733 = vmatpush1.msra.mxu0 0.0
    %734 = vmatprep.subr.mxu0 0.0
    %735 = vmatpush1.msra.mxu0 0.0
    %736 = vmatprep.subr.mxu0 0.0
    %737 = vmatpush1.msra.mxu0 0.0
    %738 = vmatprep.subr.mxu0 0.0
    %739 = vmatpush1.msra.mxu0 0.0
    %740 = vmatprep.subr.mxu0 0.0
    %741 = vmatpush1.msra.mxu0 0.0
    %742 = vmatprep.subr.mxu0 0.0
    %743 = vmatpush1.msra.mxu0 0.0
    %744 = vmatprep.subr.mxu0 0.0
    %745 = vmatpush1.msra.mxu0 0.0
    %746 = vmatprep.subr.mxu0 0.0
    %747 = vmatpush1.msra.mxu0 0.0
    %748 = vmatprep.subr.mxu0 0.0
    %749 = vmatpush1.msra.mxu0 0.0
    %750 = vmatprep.subr.mxu0 0.0
    %751 = vmatpush1.msra.mxu0 0.0
    %752 = vmatprep.subr.mxu0 0.0
    %753 = vmatpush1.msra.mxu0 0.0
    %754 = vmatprep.mubr.f32.mxu0 0.0
    %755 = vmatmul.mubr.f32.gmra.mrb[0].mxu0 %v688
    %v756 = vpop.f32.mrb[0].mxu0
    %v757 = vadd.f32 0.0, %v756
    %v758 = vpop.f32.mrb[0].mxu0
    %759 = vdwg.mxu0
    %s760 = scalar_lea.vmem [#allocation4], 12
    %v761 = vld [vmem:[%s760] sm:$0x3]
    %v762 = vadd.f32 %v761, %v757
    %v763 = vxor.u32 %v762, 2147483648
    %v764 = vmul.f32 %v763, 1.442695
    %v765 = vpow.pop %v764
    %v766 = vadd.f32 %v765, 1.0
    %v767 = vrcp.pop %v766
    %v768 = vmul.f32 1.0, %v767
    %v769 = vtanh.pop %v762
    %v770 = vmul.f32 %v768, %v675
    %772 = vrot.lane.b32.xlu0 %v769, 32
    %v773 = vpop.permute.xlu0 %772
    %v775 = vmul.f32 %v768, %v773
    %777 = vrot.lane.b32.xlu0 %v775, 32
    %v778 = vpop.permute.xlu0 %777
    %v780 = vadd.f32 %v770, %v778
    %v781 = vtanh.pop %v780
    %783 = vrot.lane.b32.xlu0 %v781, 32
    %v784 = vpop.permute.xlu0 %783
    %v786 = vmul.f32 %v768, %v784
    %788 = vrot.lane.b32.xlu0 %v786, 64
    %v789 = vpop.permute.xlu0 %788
    %s791 = scalar_lea.vmem [#allocation9], 12
    %792 = vst.msk [vmem:[%s791] sm:$0x3] %vm161, %v789
    %v793 = vsel %vm53, %v789, 0
    %795 = vmatprep.subr.mxu0 0.0
    %796 = vmatpush1.msra.mxu0 %v47
    %797 = vmatprep.subr.mxu0 0.0
    %798 = vmatpush1.msra.mxu0 %v48
    %799 = vmatprep.subr.mxu0 0.0
    %800 = vmatpush1.msra.mxu0 %v49
    %801 = vmatprep.subr.mxu0 0.0
    %802 = vmatpush1.msra.mxu0 %v50
    %803 = vmatprep.subr.mxu0 0.0
    %804 = vmatpush1.msra.mxu0 0.0
    %805 = vmatprep.subr.mxu0 0.0
    %806 = vmatpush1.msra.mxu0 0.0
    %807 = vmatprep.subr.mxu0 0.0
    %808 = vmatpush1.msra.mxu0 0.0
    %809 = vmatprep.subr.mxu0 0.0
    %810 = vmatpush1.msra.mxu0 0.0
    %811 = vmatprep.subr.mxu0 0.0
    %812 = vmatpush1.msra.mxu0 0.0
    %813 = vmatprep.subr.mxu0 0.0
    %814 = vmatpush1.msra.mxu0 0.0
    %815 = vmatprep.subr.mxu0 0.0
    %816 = vmatpush1.msra.mxu0 0.0
    %817 = vmatprep.subr.mxu0 0.0
    %818 = vmatpush1.msra.mxu0 0.0
    %819 = vmatprep.subr.mxu0 0.0
    %820 = vmatpush1.msra.mxu0 0.0
    %821 = vmatprep.subr.mxu0 0.0
    %822 = vmatpush1.msra.mxu0 0.0
    %823 = vmatprep.subr.mxu0 0.0
    %824 = vmatpush1.msra.mxu0 0.0
    %825 = vmatprep.subr.mxu0 0.0
    %826 = vmatpush1.msra.mxu0 0.0
    %827 = vmatprep.subr.mxu0 0.0
    %828 = vmatpush1.msra.mxu0 0.0
    %829 = vmatprep.subr.mxu0 0.0
    %830 = vmatpush1.msra.mxu0 0.0
    %831 = vmatprep.subr.mxu0 0.0
    %832 = vmatpush1.msra.mxu0 0.0
    %833 = vmatprep.subr.mxu0 0.0
    %834 = vmatpush1.msra.mxu0 0.0
    %835 = vmatprep.subr.mxu0 0.0
    %836 = vmatpush1.msra.mxu0 0.0
    %837 = vmatprep.subr.mxu0 0.0
    %838 = vmatpush1.msra.mxu0 0.0
    %839 = vmatprep.subr.mxu0 0.0
    %840 = vmatpush1.msra.mxu0 0.0
    %841 = vmatprep.subr.mxu0 0.0
    %842 = vmatpush1.msra.mxu0 0.0
    %843 = vmatprep.subr.mxu0 0.0
    %844 = vmatpush1.msra.mxu0 0.0
    %845 = vmatprep.subr.mxu0 0.0
    %846 = vmatpush1.msra.mxu0 0.0
    %847 = vmatprep.subr.mxu0 0.0
    %848 = vmatpush1.msra.mxu0 0.0
    %849 = vmatprep.subr.mxu0 0.0
    %850 = vmatpush1.msra.mxu0 0.0
    %851 = vmatprep.subr.mxu0 0.0
    %852 = vmatpush1.msra.mxu0 0.0
    %853 = vmatprep.subr.mxu0 0.0
    %854 = vmatpush1.msra.mxu0 0.0
    %855 = vmatprep.subr.mxu0 0.0
    %856 = vmatpush1.msra.mxu0 0.0
    %857 = vmatprep.subr.mxu0 0.0
    %858 = vmatpush1.msra.mxu0 0.0
    %859 = vmatprep.mubr.f32.mxu0 0.0
    %860 = vmatmul.mubr.f32.gmra.mrb[0].mxu0 %v793
    %v861 = vpop.f32.mrb[0].mxu0
    %v862 = vadd.f32 0.0, %v861
    %v863 = vpop.f32.mrb[0].mxu0
    %864 = vdwg.mxu0
    %s865 = scalar_lea.vmem [#allocation4], 14
    %v866 = vld [vmem:[%s865] sm:$0x3]
    %v867 = vadd.f32 %v866, %v862
    %v868 = vxor.u32 %v867, 2147483648
    %v869 = vmul.f32 %v868, 1.442695
    %v870 = vpow.pop %v869
    %v871 = vadd.f32 %v870, 1.0
    %v872 = vrcp.pop %v871
    %v873 = vmul.f32 1.0, %v872
    %v874 = vtanh.pop %v867
    %v875 = vmul.f32 %v873, %v780
    %877 = vrot.lane.b32.xlu0 %v874, 32
    %v878 = vpop.permute.xlu0 %877
    %v880 = vmul.f32 %v873, %v878
    %882 = vrot.lane.b32.xlu0 %v880, 32
    %v883 = vpop.permute.xlu0 %882
    %v885 = vadd.f32 %v875, %v883
    %v886 = vtanh.pop %v885
    %888 = vrot.lane.b32.xlu0 %v886, 32
    %v889 = vpop.permute.xlu0 %888
    %v891 = vmul.f32 %v873, %v889
    %893 = vrot.lane.b32.xlu0 %v891, 64
    %v894 = vpop.permute.xlu0 %893
    %s896 = scalar_lea.vmem [#allocation9], 14
    %897 = vst.msk [vmem:[%s896] sm:$0x3] %vm161, %v894
    %898 = vst.msk [vmem:[#allocation2] sm:$0x3] %vm161, %v894
    %900 = vrot.lane.b32.xlu0 %v885, 96
    %v901 = vpop.permute.xlu0 %900
    %903 = vst.msk [vmem:[#allocation3] sm:$0x3] %vm161, %v901
    // Predicated region
    $region22: #{_lambda_.4} parent=1 // pred_check
      _
    $region23: #{_lambda_.4} parent=1 // pred_check_branch
      %905 = sbr.rel (0) target = $region25
    $region24: #{_lambda_.4} parent=1 // pred_region
      %s907 = ssub.s32 256, 256
      %908 = vsyncadd [#allocation6], %s907
      %s909 = sshll.u32 [#allocation9], 4
      %s910 = int_to_ptr.vmem [resolvable:$true] %s909
      %915 = dma.vmem_to_hbm [thread:$0]  %s910, 256, %s2, [#allocation6], 32, 32, 2
    $region25: #{_lambda_.4} parent=1 // pred_fallthru
      _
    // Predicated region
    $region26: #{_lambda_.4} parent=1 // pred_check
      _
    $region27: #{_lambda_.4} parent=1 // pred_check_branch
      %917 = sbr.rel (0) target = $region29
    $region28: #{_lambda_.4} parent=1 // pred_region
      %918 = dma.done [#allocation6], 256
    $region29: #{_lambda_.4} parent=1 // pred_fallthru
      _
    %919 = vsyncpa [#allocation5], 1
    %920 = vsyncpa [#allocation8], 1
    %921 = vsyncpa [#allocation6], 1

</llo_original>
